<compile_context>
chip_gen: v7x
topology: tpu7x:2x2x1
jax: 0.10.0
libtpu: 0.0.40
codegen_flags: <defaults>
</compile_context>

<pallas_src>
import jax
import jax.numpy as jnp
from jax.experimental import pallas as pl
from jax.experimental.pallas import tpu as pltpu

GEN_EPS = 1e-7      # GENConv message eps
BN_EPS = 1e-5       # BatchNorm1d eps
LANE = 128          # TPU lane-tile width
_APPROX_RECIPROCAL = False   # True -> pl.reciprocal(approx=True) on the EUP slot


def _rup(v, m):
    return ((v + m - 1) // m) * m


def _block(parts, rows_phys, lanes):
    """Zero (rows_phys, lanes) block with sub-tensors written at (row, lane) offsets."""
    b = jnp.zeros((rows_phys, lanes), jnp.float32)
    for a, ro, lo in parts:
        a = jnp.asarray(a, jnp.float32)
        b = b.at[ro:ro + a.shape[0], lo:lo + a.shape[1]].set(a)
    return b


def _pack_param_slab(block_defs):
    """Packs parameter blocks into one f32 slab.

    block_defs: list of (name, parts, view_rows, view_lanes). Every block
    starts on an 8-row boundary and every view width is a multiple of 128
    lanes, so all in-kernel slices are tile-aligned.
    Returns (slab [R, L] f32, layout {name: (row0, view_rows, view_lanes)}).
    """
    lanes_max = max(v for _, _, _, v in block_defs)
    rows, layout, row0 = [], {}, 0
    for name, parts, vr, vl in block_defs:
        rp = _rup(max(vr, 1), 8)
        blk = _block(parts, rp, vl)
        if vl < lanes_max:
            blk = jnp.concatenate(
                [blk, jnp.zeros((rp, lanes_max - vl), jnp.float32)], axis=1)
        rows.append(blk)
        layout[name] = (row0, vr, vl)
        row0 += rp
    return jnp.concatenate(rows, axis=0), layout


def _vmem_tile_bytes(r, c, itemsize=4):
    return _rup(int(r), 8) * _rup(int(c), LANE) * itemsize


def _make_kernel(layout):
    """Builds the fused NormalGCN kernel with a static param-slab layout."""

    def kernel(x_ref, ea_ref, S_ref, Dt_ref, he_ref, p_ref, out_ref):
        def view(name):
            r, k, f = layout[name]
            return p_ref[r:r + k, :f]          # 8-row-aligned, 128-lane-aligned

        x = x_ref[...]                          # f32 [N, in_dim]
        ea = ea_ref[...]                        # f32 [E, edge_dim]
        S = S_ref[...]                          # f32 [E, N] 0/1 source one-hot
        Dt = Dt_ref[...]                        # f32 [E, N] 0/1 dest one-hot
        has_edge = he_ref[...] > 0.5            # bool [N, 1] (in-degree > 0)

        def aggregate(h_src, h_dst, edge_emb):
            # h_src/h_dst: [N,128] lane slabs; edge_emb: [E,128] lane slab.
            # Gather x_j = h_src[src[e]] as one MXU matmul (f32 accumulate).
            xj = jnp.dot(S, h_src, preferred_element_type=jnp.float32)     # [E,128]
            msg = jnp.maximum(xj + edge_emb, 0.0) + GEN_EPS
            # Softmax aggregation (t=1), stabilized with the per-feature
            # global max (exact for the softmax ratio; see module TODO).
            expm = jnp.exp(msg - jnp.max(msg, axis=0, keepdims=True))
            # Fused denom|numer scatter RHS: two full 128-lane tiles so the
            # splits below are free lane-group selects (2 MXU tiles on v5e).
            packed = jnp.concatenate([expm, expm * msg], axis=-1)          # [E,256]
            # Destination scatter without a transposed operand: contract the
            # edge axis (dim 0) of the [E,N] one-hot with dim 0 of packed.
            dn = jax.lax.dot_general(Dt, packed, (((0,), (0,)), ((), ())),
                                     preferred_element_type=jnp.float32)   # [N,256]
            denom, numer = dn[:, :LANE], dn[:, LANE:]
            d_safe = jnp.where(denom > 0.0, denom, 1.0)
            inv = (pl.reciprocal(d_safe, approx=True) if _APPROX_RECIPROCAL
                   else 1.0 / d_safe)
            # Nodes with no incoming edges aggregate to exactly 0 (PyG).
            agg = jnp.where(has_edge, numer * inv, 0.0)
            return agg + h_dst

        def mlp(h, wa, ba, g, be, wb, bb):
            # Linear -> BatchNorm1d (training batch stats) -> ReLU -> Linear.
            z = jnp.dot(h, view(wa), preferred_element_type=jnp.float32) + view(ba)
            # Single-pass batch statistics (biased variance, like PyTorch).
            n_inv = 1.0 / z.shape[0]
            mean = jnp.sum(z, axis=0, keepdims=True) * n_inv
            e_sq = jnp.sum(z * z, axis=0, keepdims=True) * n_inv
            var = jnp.maximum(e_sq - mean * mean, 0.0)
            z = (z - mean) * jax.lax.rsqrt(var + BN_EPS) * view(g) + view(be)
            z = jnp.maximum(z, 0.0)
            return jnp.dot(z, view(wb), preferred_element_type=jnp.float32) + view(bb)

        # F.dropout(p=0.1) is run as identity (deterministic / inference).
        # Fused lin_src|lin_dst and lin_edge(1)|lin_edge(2) projections; the
        # halves live in lanes [0:128) and [128:256), so every split below is
        # a 128-lane-aligned select.
        hz = (jnp.dot(x, view("w_srcdst"), preferred_element_type=jnp.float32)
              + view("b_srcdst"))                                           # [N,256]
        ez = (jnp.dot(ea, view("w_edge"), preferred_element_type=jnp.float32)
              + view("b_edge"))                                             # [E,256]

        # --- GENConv layer 1 (in != out: lin_src / lin_dst present) ---
        h = aggregate(hz[:, :LANE], hz[:, LANE:], ez[:, :LANE])
        h = mlp(h, "w_m1a", "b_m1a", "g1", "be1", "w_m1b", "b_m1b")
        h = jnp.maximum(h, 0.0)                      # F.relu between convs

        # --- GENConv layer 2 (in == out: only lin_edge present) ---
        h = aggregate(h, h, ez[:, LANE:])
        h = mlp(h, "w_m2a", "b_m2a", "g2", "be2", "w_m2b", "b_m2b")
        h = jnp.maximum(h, 0.0)                      # F.relu in NormalGCN

        # Final fc, written as a lane-dense exactly-128-wide zero-padded slab.
        out_ref[...] = (jnp.dot(h, view("w_fc"), preferred_element_type=jnp.float32)
                        + view("b_fc"))

    return kernel


def normal_gcn_forward(x, edge_index, edge_attr, params):
    """Runs the fused Pallas kernel; returns per-node logits [N, output_dim]."""
    (w_src1, b_src1, w_edge1, b_edge1, w_dst1, b_dst1,
     w_m1a, b_m1a, g1, be1, w_m1b, b_m1b,
     w_edge2, b_edge2, w_m2a, b_m2a, g2, be2, w_m2b, b_m2b,
     w_fc, b_fc) = params

    N, in_dim = x.shape
    E, edge_dim = edge_attr.shape
    h1 = w_src1.shape[1]
    h2 = w_edge2.shape[1]
    out_dim = w_fc.shape[1]
    out_lanes = _rup(out_dim, LANE)

    # Single-lane-tile slab design + layer-2 has no lin_src/dst (in == out).
    assert max(in_dim, edge_dim, 2 * h1, 2 * h2, out_dim) <= LANE
    assert h1 == h2

    src, dst = edge_index[0], edge_index[1]
    # Dense 0/1 gather/scatter operators, BOTH kept in the same [E, N] layout
    # (no host transpose); f32 so the data operands need no in-kernel casts.
    S = jax.nn.one_hot(src, N, dtype=jnp.float32)        # [E, N] source one-hot
    Dt = jax.nn.one_hot(dst, N, dtype=jnp.float32)       # [E, N] dest one-hot
    has_edge = (jnp.sum(Dt, axis=0) > 0.0).astype(jnp.float32).reshape(N, 1)

    blocks = [
        # Fused src|dst and edge1|edge2 projections: halves at lanes 0 / 128.
        ("w_srcdst", [(w_src1, 0, 0), (w_dst1, 0, LANE)], in_dim, 2 * LANE),
        ("b_srcdst", [(b_src1, 0, 0), (b_dst1, 0, LANE)], 1, 2 * LANE),
        ("w_edge",   [(w_edge1, 0, 0), (w_edge2, 0, LANE)], edge_dim, 2 * LANE),
        ("b_edge",   [(b_edge1, 0, 0), (b_edge2, 0, LANE)], 1, 2 * LANE),
        # MLP / fc weights: rows zero-padded to 128 so they contract directly
        # against the 128-lane activation slabs (no misaligned slices).
        ("w_m1a", [(w_m1a, 0, 0)], LANE, LANE),
        ("b_m1a", [(b_m1a, 0, 0)], 1, LANE),
        ("g1",    [(g1, 0, 0)], 1, LANE),
        ("be1",   [(be1, 0, 0)], 1, LANE),
        ("w_m1b", [(w_m1b, 0, 0)], LANE, LANE),
        ("b_m1b", [(b_m1b, 0, 0)], 1, LANE),
        ("w_m2a", [(w_m2a, 0, 0)], LANE, LANE),
        ("b_m2a", [(b_m2a, 0, 0)], 1, LANE),
        ("g2",    [(g2, 0, 0)], 1, LANE),
        ("be2",   [(be2, 0, 0)], 1, LANE),
        ("w_m2b", [(w_m2b, 0, 0)], LANE, LANE),
        ("b_m2b", [(b_m2b, 0, 0)], 1, LANE),
        # fc padded to exactly out_lanes (decoupled from the slab lane width).
        ("w_fc",  [(w_fc, 0, 0)], LANE, out_lanes),
        ("b_fc",  [(b_fc, 0, 0)], 1, out_lanes),
    ]
    slab, layout = _pack_param_slab(blocks)

    # VMEM limit sized from actual (8,128)-padded buffer bytes (+2x headroom)
    # instead of a flat 32 MiB.
    io_bytes = (_vmem_tile_bytes(N, in_dim) + _vmem_tile_bytes(E, edge_dim)
                + 2 * _vmem_tile_bytes(E, N) + _vmem_tile_bytes(N, 1)
                + _vmem_tile_bytes(*slab.shape) + _vmem_tile_bytes(N, out_lanes))
    interm_bytes = (2 * _vmem_tile_bytes(N, 2 * LANE)
                    + 2 * _vmem_tile_bytes(E, 2 * LANE)
                    + 6 * _vmem_tile_bytes(E, LANE)
                    + 8 * _vmem_tile_bytes(N, LANE))
    vmem_limit = int(min(max(2 * (io_bytes + interm_bytes) + (4 << 20), 16 << 20),
                         96 << 20))

    vmem = pl.BlockSpec(memory_space=pltpu.MemorySpace.VMEM)
    out_pad = pl.pallas_call(
        _make_kernel(layout),
        out_shape=jax.ShapeDtypeStruct((N, out_lanes), jnp.float32),
        in_specs=[vmem] * 6,
        out_specs=vmem,
        compiler_params=pltpu.CompilerParams(vmem_limit_bytes=vmem_limit),
    )(x.astype(jnp.float32), edge_attr.astype(jnp.float32), S, Dt, has_edge, slab)

    return out_pad[:, :out_dim]


def init_params(key, input_dim, edge_dim, hidden1, hidden2, output_dim):
    """Deterministic PyTorch-style (uniform +/- 1/sqrt(fan_in)) init."""
    def lin(k, fan_in, fan_out):
        k1, k2 = jax.random.split(k)
        bound = 1.0 / (fan_in ** 0.5)
        w = jax.random.uniform(k1, (fan_in, fan_out), jnp.float32, -bound, bound)
        b = jax.random.uniform(k2, (1, fan_out), jnp.float32, -bound, bound)
        return w, b

    ks = jax.random.split(key, 9)
    w_src1, b_src1 = lin(ks[0], input_dim, hidden1)
    w_edge1, b_edge1 = lin(ks[1], edge_dim, hidden1)
    w_dst1, b_dst1 = lin(ks[2], input_dim, hidden1)
    w_m1a, b_m1a = lin(ks[3], hidden1, 2 * hidden1)
    g1 = jnp.ones((1, 2 * hidden1), jnp.float32)
    be1 = jnp.zeros((1, 2 * hidden1), jnp.float32)
    w_m1b, b_m1b = lin(ks[4], 2 * hidden1, hidden1)

    w_edge2, b_edge2 = lin(ks[5], edge_dim, hidden2)
    w_m2a, b_m2a = lin(ks[6], hidden2, 2 * hidden2)
    g2 = jnp.ones((1, 2 * hidden2), jnp.float32)
    be2 = jnp.zeros((1, 2 * hidden2), jnp.float32)
    w_m2b, b_m2b = lin(ks[7], 2 * hidden2, hidden2)

    w_fc, b_fc = lin(ks[8], hidden2, output_dim)

    # NOTE: NormalGCN.MLP (edge scorer), k and temperature are unused in the
    # reference forward pass, so no parameters are created for them here.
    return [w_src1, b_src1, w_edge1, b_edge1, w_dst1, b_dst1,
            w_m1a, b_m1a, g1, be1, w_m1b, b_m1b,
            w_edge2, b_edge2, w_m2a, b_m2a, g2, be2, w_m2b, b_m2b,
            w_fc, b_fc]


if __name__ == "__main__":
    key = jax.random.PRNGKey(0)
    N, E = 16, 32
    input_dim, edge_feature_dim = 8, 4
    hidden1 = hidden2 = 16
    output_dim = 4

    kx, ke, ks, kd, km, kp = jax.random.split(key, 6)
    x = jax.random.normal(kx, (N, input_dim), jnp.float32)
    edge_attr = jax.random.normal(ke, (E, edge_feature_dim), jnp.float32)
    src = jax.random.randint(ks, (E,), 0, N)
    dst = jax.random.randint(kd, (E,), 0, N)
    edge_index = jnp.stack([src, dst])                       # [2, E]
    node_mask = (jax.random.uniform(km, (N,)) > 0.3).astype(jnp.int32)

    params = init_params(kp, input_dim, edge_feature_dim, hidden1, hidden2,
                         output_dim)

    logits = normal_gcn_forward(x, edge_index, edge_attr, params)
    logits = jax.block_until_ready(logits)                   # [N, output_dim]

    # x[node_mask != 0]: data-dependent output shape -> applied outside the
    # kernel with concrete values (host-side glue).
    selected = logits[node_mask != 0]
    jax.block_until_ready(selected)

    assert logits.shape == (N, output_dim)
    assert selected.shape[1] == output_dim
    assert bool(jnp.all(jnp.isfinite(logits)))
    print("KERNEL_OK")
</pallas_src>

<mosaic_0001>
module attributes {stable_mosaic.version = 11 : i64} {
  func.func @kernel(%arg0: memref<16x8xf32, #tpu.memory_space<vmem>>, %arg1: memref<32x4xf32, #tpu.memory_space<vmem>>, %arg2: memref<32x16xf32, #tpu.memory_space<vmem>>, %arg3: memref<32x16xf32, #tpu.memory_space<vmem>>, %arg4: memref<16x1xf32, #tpu.memory_space<vmem>>, %arg5: memref<744x256xf32, #tpu.memory_space<vmem>>, %arg6: memref<16x128xf32, #tpu.memory_space<vmem>>) attributes {dimension_semantics = [], scalar_prefetch = 0 : i64, scratch_operands = 0 : i64, tpu.core_type = #tpu.core_type<tc>} {
    %c0 = arith.constant 0 : index
    %c0_0 = arith.constant 0 : index
    %0 = vector.load %arg0[%c0, %c0_0] : memref<16x8xf32, #tpu.memory_space<vmem>>, vector<16x8xf32>
    %c0_1 = arith.constant 0 : index
    %c0_2 = arith.constant 0 : index
    %1 = vector.load %arg1[%c0_1, %c0_2] : memref<32x4xf32, #tpu.memory_space<vmem>>, vector<32x4xf32>
    %c0_3 = arith.constant 0 : index
    %c0_4 = arith.constant 0 : index
    %2 = vector.load %arg2[%c0_3, %c0_4] : memref<32x16xf32, #tpu.memory_space<vmem>>, vector<32x16xf32>
    %c0_5 = arith.constant 0 : index
    %c0_6 = arith.constant 0 : index
    %3 = vector.load %arg3[%c0_5, %c0_6] : memref<32x16xf32, #tpu.memory_space<vmem>>, vector<32x16xf32>
    %c0_7 = arith.constant 0 : index
    %c0_8 = arith.constant 0 : index
    %4 = vector.load %arg4[%c0_7, %c0_8] : memref<16x1xf32, #tpu.memory_space<vmem>>, vector<16x1xf32>
    %cst = arith.constant 5.000000e-01 : f32
    %5 = vector.broadcast %cst : f32 to vector<16x1xf32>
    %6 = arith.cmpf ogt, %4, %5 : vector<16x1xf32>
    %c0_9 = arith.constant 0 : index
    %c0_10 = arith.constant 0 : index
    %7 = vector.load %arg5[%c0_9, %c0_10] : memref<744x256xf32, #tpu.memory_space<vmem>>, vector<8x256xf32>
    %cst_11 = arith.constant dense<0.000000e+00> : vector<16x256xf32>
    %8 = tpu.matmul %0, %7, %cst_11 {dimension_numbers = #tpu.dot_dimension_numbers<[1], [0], [0], [1], [0, 0, 1, 1], [], []>} : vector<16x8xf32>, vector<8x256xf32>, vector<16x256xf32> -> vector<16x256xf32>
    %c8 = arith.constant 8 : index
    %c0_12 = arith.constant 0 : index
    %9 = vector.load %arg5[%c8, %c0_12] : memref<744x256xf32, #tpu.memory_space<vmem>>, vector<1x256xf32>
    %10 = vector.broadcast %9 : vector<1x256xf32> to vector<16x256xf32>
    %11 = arith.addf %8, %10 : vector<16x256xf32>
    %c16 = arith.constant 16 : index
    %c0_13 = arith.constant 0 : index
    %12 = vector.load %arg5[%c16, %c0_13] : memref<744x256xf32, #tpu.memory_space<vmem>>, vector<4x256xf32>
    %cst_14 = arith.constant dense<0.000000e+00> : vector<32x256xf32>
    %13 = tpu.matmul %1, %12, %cst_14 {dimension_numbers = #tpu.dot_dimension_numbers<[1], [0], [0], [1], [0, 0, 1, 1], [], []>} : vector<32x4xf32>, vector<4x256xf32>, vector<32x256xf32> -> vector<32x256xf32>
    %c24 = arith.constant 24 : index
    %c0_15 = arith.constant 0 : index
    %14 = vector.load %arg5[%c24, %c0_15] : memref<744x256xf32, #tpu.memory_space<vmem>>, vector<1x256xf32>
    %15 = vector.broadcast %14 : vector<1x256xf32> to vector<32x256xf32>
    %16 = arith.addf %13, %15 : vector<32x256xf32>
    %17 = vector.extract_strided_slice %11 {offsets = [0, 0], sizes = [16, 128], strides = [1, 1]} : vector<16x256xf32> to vector<16x128xf32>
    %18 = vector.extract_strided_slice %11 {offsets = [0, 128], sizes = [16, 128], strides = [1, 1]} : vector<16x256xf32> to vector<16x128xf32>
    %19 = vector.extract_strided_slice %16 {offsets = [0, 0], sizes = [32, 128], strides = [1, 1]} : vector<32x256xf32> to vector<32x128xf32>
    %cst_16 = arith.constant dense<0.000000e+00> : vector<32x128xf32>
    %20 = tpu.matmul %2, %17, %cst_16 {dimension_numbers = #tpu.dot_dimension_numbers<[1], [0], [0], [1], [0, 0, 1, 1], [], []>} : vector<32x16xf32>, vector<16x128xf32>, vector<32x128xf32> -> vector<32x128xf32>
    %21 = arith.addf %20, %19 : vector<32x128xf32>
    %cst_17 = arith.constant 0.000000e+00 : f32
    %22 = vector.broadcast %cst_17 : f32 to vector<32x128xf32>
    %23 = arith.maximumf %21, %22 : vector<32x128xf32>
    %cst_18 = arith.constant 1.000000e-07 : f32
    %24 = vector.broadcast %cst_18 : f32 to vector<32x128xf32>
    %25 = arith.addf %23, %24 : vector<32x128xf32>
    %cst_19 = arith.constant dense<0xFF800000> : vector<128xf32>
    %26 = vector.multi_reduction <maximumf>, %25, %cst_19 [0] : vector<32x128xf32> to vector<128xf32>
    %27 = vector.shape_cast %26 : vector<128xf32> to vector<1x128xf32>
    %28 = vector.broadcast %27 : vector<1x128xf32> to vector<32x128xf32>
    %29 = arith.subf %25, %28 : vector<32x128xf32>
    %30 = math.exp %29 : vector<32x128xf32>
    %31 = arith.mulf %30, %25 : vector<32x128xf32>
    %32 = tpu.concatenate %30, %31 in 1 : vector<32x128xf32>, vector<32x128xf32> -> vector<32x256xf32>
    %cst_20 = arith.constant dense<0.000000e+00> : vector<16x256xf32>
    %33 = tpu.matmul %3, %32, %cst_20 {dimension_numbers = #tpu.dot_dimension_numbers<[0], [0], [1], [1], [0, 1, 1, 1], [], []>} : vector<32x16xf32>, vector<32x256xf32>, vector<16x256xf32> -> vector<16x256xf32>
    %34 = vector.extract_strided_slice %33 {offsets = [0, 0], sizes = [16, 128], strides = [1, 1]} : vector<16x256xf32> to vector<16x128xf32>
    %35 = vector.extract_strided_slice %33 {offsets = [0, 128], sizes = [16, 128], strides = [1, 1]} : vector<16x256xf32> to vector<16x128xf32>
    %cst_21 = arith.constant 0.000000e+00 : f32
    %36 = vector.broadcast %cst_21 : f32 to vector<16x128xf32>
    %37 = arith.cmpf ogt, %34, %36 : vector<16x128xf32>
    %cst_22 = arith.constant 1.000000e+00 : f32
    %38 = vector.broadcast %cst_22 : f32 to vector<16x128xf32>
    %39 = arith.select %37, %34, %38 : vector<16x128xi1>, vector<16x128xf32>
    %cst_23 = arith.constant 1.000000e+00 : f32
    %40 = vector.broadcast %cst_23 : f32 to vector<16x128xf32>
    %41 = arith.divf %40, %39 : vector<16x128xf32>
    %42 = arith.mulf %35, %41 : vector<16x128xf32>
    %cst_24 = arith.constant 0.000000e+00 : f32
    %43 = vector.shape_cast %6 : vector<16x1xi1> to vector<16x1xi1>
    %44 = vector.broadcast %43 : vector<16x1xi1> to vector<16x128xi1>
    %45 = vector.broadcast %cst_24 : f32 to vector<16x128xf32>
    %46 = arith.select %44, %42, %45 : vector<16x128xi1>, vector<16x128xf32>
    %47 = arith.addf %46, %18 : vector<16x128xf32>
    %c32 = arith.constant 32 : index
    %c0_25 = arith.constant 0 : index
    %48 = vector.load %arg5[%c32, %c0_25] : memref<744x256xf32, #tpu.memory_space<vmem>>, vector<128x128xf32>
    %cst_26 = arith.constant dense<0.000000e+00> : vector<16x128xf32>
    %49 = tpu.matmul %47, %48, %cst_26 {dimension_numbers = #tpu.dot_dimension_numbers<[1], [0], [0], [1], [0, 0, 1, 1], [], []>} : vector<16x128xf32>, vector<128x128xf32>, vector<16x128xf32> -> vector<16x128xf32>
    %c160 = arith.constant 160 : index
    %c0_27 = arith.constant 0 : index
    %50 = vector.load %arg5[%c160, %c0_27] : memref<744x256xf32, #tpu.memory_space<vmem>>, vector<1x128xf32>
    %51 = vector.broadcast %50 : vector<1x128xf32> to vector<16x128xf32>
    %52 = arith.addf %49, %51 : vector<16x128xf32>
    %cst_28 = arith.constant dense<0.000000e+00> : vector<128xf32>
    %53 = vector.multi_reduction <add>, %52, %cst_28 [0] : vector<16x128xf32> to vector<128xf32>
    %54 = vector.shape_cast %53 : vector<128xf32> to vector<1x128xf32>
    %cst_29 = arith.constant 6.250000e-02 : f32
    %55 = vector.broadcast %cst_29 : f32 to vector<1x128xf32>
    %56 = arith.mulf %54, %55 : vector<1x128xf32>
    %57 = arith.mulf %52, %52 : vector<16x128xf32>
    %cst_30 = arith.constant dense<0.000000e+00> : vector<128xf32>
    %58 = vector.multi_reduction <add>, %57, %cst_30 [0] : vector<16x128xf32> to vector<128xf32>
    %59 = vector.shape_cast %58 : vector<128xf32> to vector<1x128xf32>
    %cst_31 = arith.constant 6.250000e-02 : f32
    %60 = vector.broadcast %cst_31 : f32 to vector<1x128xf32>
    %61 = arith.mulf %59, %60 : vector<1x128xf32>
    %62 = arith.mulf %56, %56 : vector<1x128xf32>
    %63 = arith.subf %61, %62 : vector<1x128xf32>
    %cst_32 = arith.constant 0.000000e+00 : f32
    %64 = vector.broadcast %cst_32 : f32 to vector<1x128xf32>
    %65 = arith.maximumf %63, %64 : vector<1x128xf32>
    %66 = vector.broadcast %56 : vector<1x128xf32> to vector<16x128xf32>
    %67 = arith.subf %52, %66 : vector<16x128xf32>
    %cst_33 = arith.constant 9.99999974E-6 : f32
    %68 = vector.broadcast %cst_33 : f32 to vector<1x128xf32>
    %69 = arith.addf %65, %68 : vector<1x128xf32>
    %70 = math.rsqrt %69 : vector<1x128xf32>
    %71 = vector.broadcast %70 : vector<1x128xf32> to vector<16x128xf32>
    %72 = arith.mulf %67, %71 : vector<16x128xf32>
    %c168 = arith.constant 168 : index
    %c0_34 = arith.constant 0 : index
    %73 = vector.load %arg5[%c168, %c0_34] : memref<744x256xf32, #tpu.memory_space<vmem>>, vector<1x128xf32>
    %74 = vector.broadcast %73 : vector<1x128xf32> to vector<16x128xf32>
    %75 = arith.mulf %72, %74 : vector<16x128xf32>
    %c176 = arith.constant 176 : index
    %c0_35 = arith.constant 0 : index
    %76 = vector.load %arg5[%c176, %c0_35] : memref<744x256xf32, #tpu.memory_space<vmem>>, vector<1x128xf32>
    %77 = vector.broadcast %76 : vector<1x128xf32> to vector<16x128xf32>
    %78 = arith.addf %75, %77 : vector<16x128xf32>
    %cst_36 = arith.constant 0.000000e+00 : f32
    %79 = vector.broadcast %cst_36 : f32 to vector<16x128xf32>
    %80 = arith.maximumf %78, %79 : vector<16x128xf32>
    %c184 = arith.constant 184 : index
    %c0_37 = arith.constant 0 : index
    %81 = vector.load %arg5[%c184, %c0_37] : memref<744x256xf32, #tpu.memory_space<vmem>>, vector<128x128xf32>
    %cst_38 = arith.constant dense<0.000000e+00> : vector<16x128xf32>
    %82 = tpu.matmul %80, %81, %cst_38 {dimension_numbers = #tpu.dot_dimension_numbers<[1], [0], [0], [1], [0, 0, 1, 1], [], []>} : vector<16x128xf32>, vector<128x128xf32>, vector<16x128xf32> -> vector<16x128xf32>
    %c312 = arith.constant 312 : index
    %c0_39 = arith.constant 0 : index
    %83 = vector.load %arg5[%c312, %c0_39] : memref<744x256xf32, #tpu.memory_space<vmem>>, vector<1x128xf32>
    %84 = vector.broadcast %83 : vector<1x128xf32> to vector<16x128xf32>
    %85 = arith.addf %82, %84 : vector<16x128xf32>
    %cst_40 = arith.constant 0.000000e+00 : f32
    %86 = vector.broadcast %cst_40 : f32 to vector<16x128xf32>
    %87 = arith.maximumf %85, %86 : vector<16x128xf32>
    %88 = vector.extract_strided_slice %16 {offsets = [0, 128], sizes = [32, 128], strides = [1, 1]} : vector<32x256xf32> to vector<32x128xf32>
    %cst_41 = arith.constant dense<0.000000e+00> : vector<32x128xf32>
    %89 = tpu.matmul %2, %87, %cst_41 {dimension_numbers = #tpu.dot_dimension_numbers<[1], [0], [0], [1], [0, 0, 1, 1], [], []>} : vector<32x16xf32>, vector<16x128xf32>, vector<32x128xf32> -> vector<32x128xf32>
    %90 = arith.addf %89, %88 : vector<32x128xf32>
    %cst_42 = arith.constant 0.000000e+00 : f32
    %91 = vector.broadcast %cst_42 : f32 to vector<32x128xf32>
    %92 = arith.maximumf %90, %91 : vector<32x128xf32>
    %cst_43 = arith.constant 1.000000e-07 : f32
    %93 = vector.broadcast %cst_43 : f32 to vector<32x128xf32>
    %94 = arith.addf %92, %93 : vector<32x128xf32>
    %cst_44 = arith.constant dense<0xFF800000> : vector<128xf32>
    %95 = vector.multi_reduction <maximumf>, %94, %cst_44 [0] : vector<32x128xf32> to vector<128xf32>
    %96 = vector.shape_cast %95 : vector<128xf32> to vector<1x128xf32>
    %97 = vector.broadcast %96 : vector<1x128xf32> to vector<32x128xf32>
    %98 = arith.subf %94, %97 : vector<32x128xf32>
    %99 = math.exp %98 : vector<32x128xf32>
    %100 = arith.mulf %99, %94 : vector<32x128xf32>
    %101 = tpu.concatenate %99, %100 in 1 : vector<32x128xf32>, vector<32x128xf32> -> vector<32x256xf32>
    %cst_45 = arith.constant dense<0.000000e+00> : vector<16x256xf32>
    %102 = tpu.matmul %3, %101, %cst_45 {dimension_numbers = #tpu.dot_dimension_numbers<[0], [0], [1], [1], [0, 1, 1, 1], [], []>} : vector<32x16xf32>, vector<32x256xf32>, vector<16x256xf32> -> vector<16x256xf32>
    %103 = vector.extract_strided_slice %102 {offsets = [0, 0], sizes = [16, 128], strides = [1, 1]} : vector<16x256xf32> to vector<16x128xf32>
    %104 = vector.extract_strided_slice %102 {offsets = [0, 128], sizes = [16, 128], strides = [1, 1]} : vector<16x256xf32> to vector<16x128xf32>
    %cst_46 = arith.constant 0.000000e+00 : f32
    %105 = vector.broadcast %cst_46 : f32 to vector<16x128xf32>
    %106 = arith.cmpf ogt, %103, %105 : vector<16x128xf32>
    %cst_47 = arith.constant 1.000000e+00 : f32
    %107 = vector.broadcast %cst_47 : f32 to vector<16x128xf32>
    %108 = arith.select %106, %103, %107 : vector<16x128xi1>, vector<16x128xf32>
    %cst_48 = arith.constant 1.000000e+00 : f32
    %109 = vector.broadcast %cst_48 : f32 to vector<16x128xf32>
    %110 = arith.divf %109, %108 : vector<16x128xf32>
    %111 = arith.mulf %104, %110 : vector<16x128xf32>
    %cst_49 = arith.constant 0.000000e+00 : f32
    %112 = vector.shape_cast %6 : vector<16x1xi1> to vector<16x1xi1>
    %113 = vector.broadcast %112 : vector<16x1xi1> to vector<16x128xi1>
    %114 = vector.broadcast %cst_49 : f32 to vector<16x128xf32>
    %115 = arith.select %113, %111, %114 : vector<16x128xi1>, vector<16x128xf32>
    %116 = arith.addf %115, %87 : vector<16x128xf32>
    %c320 = arith.constant 320 : index
    %c0_50 = arith.constant 0 : index
    %117 = vector.load %arg5[%c320, %c0_50] : memref<744x256xf32, #tpu.memory_space<vmem>>, vector<128x128xf32>
    %cst_51 = arith.constant dense<0.000000e+00> : vector<16x128xf32>
    %118 = tpu.matmul %116, %117, %cst_51 {dimension_numbers = #tpu.dot_dimension_numbers<[1], [0], [0], [1], [0, 0, 1, 1], [], []>} : vector<16x128xf32>, vector<128x128xf32>, vector<16x128xf32> -> vector<16x128xf32>
    %c448 = arith.constant 448 : index
    %c0_52 = arith.constant 0 : index
    %119 = vector.load %arg5[%c448, %c0_52] : memref<744x256xf32, #tpu.memory_space<vmem>>, vector<1x128xf32>
    %120 = vector.broadcast %119 : vector<1x128xf32> to vector<16x128xf32>
    %121 = arith.addf %118, %120 : vector<16x128xf32>
    %cst_53 = arith.constant dense<0.000000e+00> : vector<128xf32>
    %122 = vector.multi_reduction <add>, %121, %cst_53 [0] : vector<16x128xf32> to vector<128xf32>
    %123 = vector.shape_cast %122 : vector<128xf32> to vector<1x128xf32>
    %cst_54 = arith.constant 6.250000e-02 : f32
    %124 = vector.broadcast %cst_54 : f32 to vector<1x128xf32>
    %125 = arith.mulf %123, %124 : vector<1x128xf32>
    %126 = arith.mulf %121, %121 : vector<16x128xf32>
    %cst_55 = arith.constant dense<0.000000e+00> : vector<128xf32>
    %127 = vector.multi_reduction <add>, %126, %cst_55 [0] : vector<16x128xf32> to vector<128xf32>
    %128 = vector.shape_cast %127 : vector<128xf32> to vector<1x128xf32>
    %cst_56 = arith.constant 6.250000e-02 : f32
    %129 = vector.broadcast %cst_56 : f32 to vector<1x128xf32>
    %130 = arith.mulf %128, %129 : vector<1x128xf32>
    %131 = arith.mulf %125, %125 : vector<1x128xf32>
    %132 = arith.subf %130, %131 : vector<1x128xf32>
    %cst_57 = arith.constant 0.000000e+00 : f32
    %133 = vector.broadcast %cst_57 : f32 to vector<1x128xf32>
    %134 = arith.maximumf %132, %133 : vector<1x128xf32>
    %135 = vector.broadcast %125 : vector<1x128xf32> to vector<16x128xf32>
    %136 = arith.subf %121, %135 : vector<16x128xf32>
    %cst_58 = arith.constant 9.99999974E-6 : f32
    %137 = vector.broadcast %cst_58 : f32 to vector<1x128xf32>
    %138 = arith.addf %134, %137 : vector<1x128xf32>
    %139 = math.rsqrt %138 : vector<1x128xf32>
    %140 = vector.broadcast %139 : vector<1x128xf32> to vector<16x128xf32>
    %141 = arith.mulf %136, %140 : vector<16x128xf32>
    %c456 = arith.constant 456 : index
    %c0_59 = arith.constant 0 : index
    %142 = vector.load %arg5[%c456, %c0_59] : memref<744x256xf32, #tpu.memory_space<vmem>>, vector<1x128xf32>
    %143 = vector.broadcast %142 : vector<1x128xf32> to vector<16x128xf32>
    %144 = arith.mulf %141, %143 : vector<16x128xf32>
    %c464 = arith.constant 464 : index
    %c0_60 = arith.constant 0 : index
    %145 = vector.load %arg5[%c464, %c0_60] : memref<744x256xf32, #tpu.memory_space<vmem>>, vector<1x128xf32>
    %146 = vector.broadcast %145 : vector<1x128xf32> to vector<16x128xf32>
    %147 = arith.addf %144, %146 : vector<16x128xf32>
    %cst_61 = arith.constant 0.000000e+00 : f32
    %148 = vector.broadcast %cst_61 : f32 to vector<16x128xf32>
    %149 = arith.maximumf %147, %148 : vector<16x128xf32>
    %c472 = arith.constant 472 : index
    %c0_62 = arith.constant 0 : index
    %150 = vector.load %arg5[%c472, %c0_62] : memref<744x256xf32, #tpu.memory_space<vmem>>, vector<128x128xf32>
    %cst_63 = arith.constant dense<0.000000e+00> : vector<16x128xf32>
    %151 = tpu.matmul %149, %150, %cst_63 {dimension_numbers = #tpu.dot_dimension_numbers<[1], [0], [0], [1], [0, 0, 1, 1], [], []>} : vector<16x128xf32>, vector<128x128xf32>, vector<16x128xf32> -> vector<16x128xf32>
    %c600 = arith.constant 600 : index
    %c0_64 = arith.constant 0 : index
    %152 = vector.load %arg5[%c600, %c0_64] : memref<744x256xf32, #tpu.memory_space<vmem>>, vector<1x128xf32>
    %153 = vector.broadcast %152 : vector<1x128xf32> to vector<16x128xf32>
    %154 = arith.addf %151, %153 : vector<16x128xf32>
    %cst_65 = arith.constant 0.000000e+00 : f32
    %155 = vector.broadcast %cst_65 : f32 to vector<16x128xf32>
    %156 = arith.maximumf %154, %155 : vector<16x128xf32>
    %c608 = arith.constant 608 : index
    %c0_66 = arith.constant 0 : index
    %157 = vector.load %arg5[%c608, %c0_66] : memref<744x256xf32, #tpu.memory_space<vmem>>, vector<128x128xf32>
    %cst_67 = arith.constant dense<0.000000e+00> : vector<16x128xf32>
    %158 = tpu.matmul %156, %157, %cst_67 {dimension_numbers = #tpu.dot_dimension_numbers<[1], [0], [0], [1], [0, 0, 1, 1], [], []>} : vector<16x128xf32>, vector<128x128xf32>, vector<16x128xf32> -> vector<16x128xf32>
    %c736 = arith.constant 736 : index
    %c0_68 = arith.constant 0 : index
    %159 = vector.load %arg5[%c736, %c0_68] : memref<744x256xf32, #tpu.memory_space<vmem>>, vector<1x128xf32>
    %160 = vector.broadcast %159 : vector<1x128xf32> to vector<16x128xf32>
    %161 = arith.addf %158, %160 : vector<16x128xf32>
    %c0_69 = arith.constant 0 : index
    %c0_70 = arith.constant 0 : index
    %162 = vector.load %arg6[%c0_69, %c0_70] : memref<16x128xf32, #tpu.memory_space<vmem>>, vector<16x128xf32>
    tpu.vector_store %arg6[%c0_69, %c0_70], %161 {strides = array<i32>} : memref<16x128xf32, #tpu.memory_space<vmem>>, vector<16x128xf32>,
    return
  }
}

</mosaic_0001>

<llo_original>
// kernel: tpu_custom_call.1
$region0: #{tpu_custom_call.1}
  #allocation0 [shape = 'u32[]', space=smem, size = 0x4, offset = 0x4, fixed_abs, tag = 'smem constant byte address 0x4 - core index']
  #allocation1 [shape = 'u32[144,128]{1,0:T(1,128)}', space=vmem, size = 0x12000, scoped, tag = 'internal scratch']
  %s0 = inlined_call_operand.vmem [shape: f32[16,8], index: 0, kind: input, shape index: {}]
  %s1 = inlined_call_operand.vmem [shape: f32[32,4], index: 1, kind: input, shape index: {}]
  %s2 = inlined_call_operand.vmem [shape: f32[32,16], index: 2, kind: input, shape index: {}]
  %s3 = inlined_call_operand.vmem [shape: f32[32,16], index: 3, kind: input, shape index: {}]
  %s4 = inlined_call_operand.vmem [shape: f32[16,1], index: 4, kind: input, shape index: {}]
  %s5 = inlined_call_operand.hbm [shape: f32[744,256], index: 5, kind: input, shape index: {}]
  %s6 = inlined_call_operand.hbm [shape: f32[16,128], index: 6, kind: output, shape index: {}]
  %s7 = sld [smem:[#allocation0]]
  $region38: #{tpu_custom_call.1} parent=0
    _
  %s9 = ssub.s32 1, %s7
  %s10 = scalar_select 0, %s9, %s7
  $region1: #{tpu_custom_call.1} parent=0
    #allocation2 [shape = 'u8[761856]{0}', space=vmem, size = 0xba000, scoped, tag = 'input window, operand 5, single buffered']
    #allocation3 [shape = 's32[1]{0}', space=sflag, size = 0x4, scoped, tag = 'scoped memory for tpu_custom_call.1']
    #allocation4 [shape = 's32[1]{0}', space=sflag, size = 0x4, scoped, tag = 'scoped memory for tpu_custom_call.1']
    #allocation5 [shape = 'u8[8192]{0}', space=vmem, size = 0x2000, scoped, tag = 'output window, operand 0, single buffered']
    %11 = vsyncpa [#allocation3], 0
    %12 = vsyncpa [#allocation4], 0
    // Predicated region
    $region2: #{tpu_custom_call.1} parent=1 // pred_check
      _
    $region3: #{tpu_custom_call.1} parent=1 // pred_check_branch
      %14 = sbr.rel (0) target = $region5
    $region4: #{tpu_custom_call.1} parent=1 // pred_region
      _
    $region5: #{tpu_custom_call.1} parent=1 // pred_fallthru
      _
    // Predicated region
    $region6: #{tpu_custom_call.1} parent=1 // pred_check
      _
    $region7: #{tpu_custom_call.1} parent=1 // pred_check_branch
      %16 = sbr.rel (0) target = $region9
    $region8: #{tpu_custom_call.1} parent=1 // pred_region
      _
    $region9: #{tpu_custom_call.1} parent=1 // pred_fallthru
      _
    // Predicated region
    $region10: #{tpu_custom_call.1} parent=1 // pred_check
      _
    $region11: #{tpu_custom_call.1} parent=1 // pred_check_branch
      %18 = sbr.rel (0) target = $region13
    $region12: #{tpu_custom_call.1} parent=1 // pred_region
      _
    $region13: #{tpu_custom_call.1} parent=1 // pred_fallthru
      _
    // Predicated region
    $region14: #{tpu_custom_call.1} parent=1 // pred_check
      _
    $region15: #{tpu_custom_call.1} parent=1 // pred_check_branch
      %20 = sbr.rel (0) target = $region17
    $region16: #{tpu_custom_call.1} parent=1 // pred_region
      _
    $region17: #{tpu_custom_call.1} parent=1 // pred_fallthru
      _
    // Predicated region
    $region18: #{tpu_custom_call.1} parent=1 // pred_check
      _
    $region19: #{tpu_custom_call.1} parent=1 // pred_check_branch
      %22 = sbr.rel (0) target = $region21
    $region20: #{tpu_custom_call.1} parent=1 // pred_region
      _
    $region21: #{tpu_custom_call.1} parent=1 // pred_fallthru
      _
    // Predicated region
    $region22: #{tpu_custom_call.1} parent=1 // pred_check
      _
    $region23: #{tpu_custom_call.1} parent=1 // pred_check_branch
      %24 = sbr.rel (0) target = $region25
    $region24: #{tpu_custom_call.1} parent=1 // pred_region
      %s26 = ssub.s32 23808, 23808
      %27 = vsyncadd [#allocation3], %s26
      %s28 = sshll.u32 [#allocation2], 4
      %s29 = int_to_ptr.vmem [resolvable:$true] %s28
      %34 = dma.hbm_to_vmem [thread:$0]  %s5, 23808, %s29, [#allocation3], 256, 256, 16
    $region25: #{tpu_custom_call.1} parent=1 // pred_fallthru
      _
    // Predicated region
    $region26: #{tpu_custom_call.1} parent=1 // pred_check
      _
    $region27: #{tpu_custom_call.1} parent=1 // pred_check_branch
      %36 = sbr.rel (0) target = $region29
    $region28: #{tpu_custom_call.1} parent=1 // pred_region
      %37 = dma.done [#allocation3], 23808
    $region29: #{tpu_custom_call.1} parent=1 // pred_fallthru
      _
    %v38 = vld [vmem:[%s0] sm:$0xff]
    %v39 = vld [vmem:[%s0 + $0x8] sm:$0xff]
    %v40 = vld [vmem:[%s1] sm:$0xff]
    %v41 = vld [vmem:[%s1 + $0x8] sm:$0xff]
    %v42 = vld [vmem:[%s1 + $0x10] sm:$0xff]
    %v43 = vld [vmem:[%s1 + $0x18] sm:$0xff]
    %v44 = vld [vmem:[%s2] sm:$0xff]
    %v45 = vld [vmem:[%s2 + $0x8] sm:$0xff]
    %v46 = vld [vmem:[%s2 + $0x10] sm:$0xff]
    %v47 = vld [vmem:[%s2 + $0x18] sm:$0xff]
    %v48 = vld [vmem:[%s3] sm:$0xff]
    %v49 = vld [vmem:[%s3 + $0x8] sm:$0xff]
    %v50 = vld [vmem:[%s3 + $0x10] sm:$0xff]
    %v51 = vld [vmem:[%s3 + $0x18] sm:$0xff]
    %v52 = vld [vmem:[%s4] sm:$0xff]
    %v53 = vld [vmem:[%s4 + $0x8] sm:$0xff]
    %vm54 = vcmp.gt.f32.partialorder %v52, 0.5
    %vm55 = vcmp.gt.f32.partialorder %v53, 0.5
    %v56 = vld [vmem:[#allocation2] sm:$0xff]
    %v57 = vld [vmem:[#allocation2 + $0x8] sm:$0xff]
    %s58 = scalar_lea.vmem [#allocation2], 16
    %v59 = vld [vmem:[%s58] ss:$8 sm:$0x3]
    %v61 = vlaneseq
    %v62 = vshrl.u32 %v61, 7
    %v63 = vsub.s32 0, %v62
    %v64 = vrot.slane %v59, %v63
    %v65 = vlaneseq
    %v66 = vshrl.u32 %v65, 7
    %v67 = vsub.s32 1, %v66
    %v68 = vrot.slane %v59, %v67
    %vm71 = vcmask 64512
    %v73 = vsel %vm71, %v38, 0
    %v76 = vsel %vm71, %v39, 0
    %78 = vmatprep.subr.mxu0 %v57
    %79 = vmatpush1.msra.mxu0 %v56
    %80 = vmatprep.subr.mxu0 0.0
    %81 = vmatpush1.msra.mxu0 0.0
    %82 = vmatprep.subr.mxu0 0.0
    %83 = vmatpush1.msra.mxu0 0.0
    %84 = vmatprep.subr.mxu0 0.0
    %85 = vmatpush1.msra.mxu0 0.0
    %86 = vmatprep.subr.mxu0 0.0
    %87 = vmatpush1.msra.mxu0 0.0
    %88 = vmatprep.subr.mxu0 0.0
    %89 = vmatpush1.msra.mxu0 0.0
    %90 = vmatprep.subr.mxu0 0.0
    %91 = vmatpush1.msra.mxu0 0.0
    %92 = vmatprep.subr.mxu0 0.0
    %93 = vmatpush1.msra.mxu0 0.0
    %94 = vmatprep.subr.mxu0 0.0
    %95 = vmatpush1.msra.mxu0 0.0
    %96 = vmatprep.subr.mxu0 0.0
    %97 = vmatpush1.msra.mxu0 0.0
    %98 = vmatprep.subr.mxu0 0.0
    %99 = vmatpush1.msra.mxu0 0.0
    %100 = vmatprep.subr.mxu0 0.0
    %101 = vmatpush1.msra.mxu0 0.0
    %102 = vmatprep.subr.mxu0 0.0
    %103 = vmatpush1.msra.mxu0 0.0
    %104 = vmatprep.subr.mxu0 0.0
    %105 = vmatpush1.msra.mxu0 0.0
    %106 = vmatprep.subr.mxu0 0.0
    %107 = vmatpush1.msra.mxu0 0.0
    %108 = vmatprep.subr.mxu0 0.0
    %109 = vmatpush1.msra.mxu0 0.0
    %110 = vmatprep.subr.mxu0 0.0
    %111 = vmatpush1.msra.mxu0 0.0
    %112 = vmatprep.subr.mxu0 0.0
    %113 = vmatpush1.msra.mxu0 0.0
    %114 = vmatprep.subr.mxu0 0.0
    %115 = vmatpush1.msra.mxu0 0.0
    %116 = vmatprep.subr.mxu0 0.0
    %117 = vmatpush1.msra.mxu0 0.0
    %118 = vmatprep.subr.mxu0 0.0
    %119 = vmatpush1.msra.mxu0 0.0
    %120 = vmatprep.subr.mxu0 0.0
    %121 = vmatpush1.msra.mxu0 0.0
    %122 = vmatprep.subr.mxu0 0.0
    %123 = vmatpush1.msra.mxu0 0.0
    %124 = vmatprep.subr.mxu0 0.0
    %125 = vmatpush1.msra.mxu0 0.0
    %126 = vmatprep.subr.mxu0 0.0
    %127 = vmatpush1.msra.mxu0 0.0
    %128 = vmatprep.subr.mxu0 0.0
    %129 = vmatpush1.msra.mxu0 0.0
    %130 = vmatprep.subr.mxu0 0.0
    %131 = vmatpush1.msra.mxu0 0.0
    %132 = vmatprep.subr.mxu0 0.0
    %133 = vmatpush1.msra.mxu0 0.0
    %134 = vmatprep.subr.mxu0 0.0
    %135 = vmatpush1.msra.mxu0 0.0
    %136 = vmatprep.subr.mxu0 0.0
    %137 = vmatpush1.msra.mxu0 0.0
    %138 = vmatprep.subr.mxu0 0.0
    %139 = vmatpush1.msra.mxu0 0.0
    %140 = vmatprep.subr.mxu0 0.0
    %141 = vmatpush1.msra.mxu0 0.0
    %142 = vmatprep.mubr.f32.mxu0 0.0
    %143 = vmatmul.mubr.f32.gmra.mrb[0].mxu0 %v73
    %v144 = vpop.f32.mrb[0].mxu0
    %v145 = vadd.f32 %v64, %v144
    %v146 = vpop.f32.mrb[0].mxu0
    %v147 = vadd.f32 %v68, %v146
    %148 = vmatprep.mubr.f32.mxu0 0.0
    %149 = vmatmul.mubr.f32.gmra.mrb[0].mxu0 %v76
    %v150 = vpop.f32.mrb[0].mxu0
    %v151 = vadd.f32 %v64, %v150
    %v152 = vpop.f32.mrb[0].mxu0
    %v153 = vadd.f32 %v68, %v152
    %154 = vdwg.mxu0
    %v155 = vld [vmem:[#allocation2 + $0x20] sm:$0xf]
    %v156 = vld [vmem:[#allocation2 + $0x28] sm:$0xf]
    %s157 = scalar_lea.vmem [#allocation2], 48
    %v158 = vld [vmem:[%s157] ss:$8 sm:$0x3]
    %v160 = vlaneseq
    %v161 = vshrl.u32 %v160, 7
    %v162 = vsub.s32 0, %v161
    %v163 = vrot.slane %v158, %v162
    %v164 = vlaneseq
    %v165 = vshrl.u32 %v164, 7
    %v166 = vsub.s32 1, %v165
    %v167 = vrot.slane %v158, %v166
    %vm170 = vcmask 31744
    %v172 = vsel %vm170, %v40, 0
    %v175 = vsel %vm170, %v41, 0
    %v178 = vsel %vm170, %v42, 0
    %v181 = vsel %vm170, %v43, 0
    %vm183 = vcmask 1043456
    %v185 = vsel %vm183, %v155, 0
    %v188 = vsel %vm183, %v156, 0
    %190 = vmatprep.subr.mxu0 %v188
    %191 = vmatpush1.msra.mxu0 %v185
    %192 = vmatprep.subr.mxu0 0.0
    %193 = vmatpush1.msra.mxu0 0.0
    %194 = vmatprep.subr.mxu0 0.0
    %195 = vmatpush1.msra.mxu0 0.0
    %196 = vmatprep.subr.mxu0 0.0
    %197 = vmatpush1.msra.mxu0 0.0
    %198 = vmatprep.subr.mxu0 0.0
    %199 = vmatpush1.msra.mxu0 0.0
    %200 = vmatprep.subr.mxu0 0.0
    %201 = vmatpush1.msra.mxu0 0.0
    %202 = vmatprep.subr.mxu0 0.0
    %203 = vmatpush1.msra.mxu0 0.0
    %204 = vmatprep.subr.mxu0 0.0
    %205 = vmatpush1.msra.mxu0 0.0
    %206 = vmatprep.subr.mxu0 0.0
    %207 = vmatpush1.msra.mxu0 0.0
    %208 = vmatprep.subr.mxu0 0.0
    %209 = vmatpush1.msra.mxu0 0.0
    %210 = vmatprep.subr.mxu0 0.0
    %211 = vmatpush1.msra.mxu0 0.0
    %212 = vmatprep.subr.mxu0 0.0
    %213 = vmatpush1.msra.mxu0 0.0
    %214 = vmatprep.subr.mxu0 0.0
    %215 = vmatpush1.msra.mxu0 0.0
    %216 = vmatprep.subr.mxu0 0.0
    %217 = vmatpush1.msra.mxu0 0.0
    %218 = vmatprep.subr.mxu0 0.0
    %219 = vmatpush1.msra.mxu0 0.0
    %220 = vmatprep.subr.mxu0 0.0
    %221 = vmatpush1.msra.mxu0 0.0
    %222 = vmatprep.subr.mxu0 0.0
    %223 = vmatpush1.msra.mxu0 0.0
    %224 = vmatprep.subr.mxu0 0.0
    %225 = vmatpush1.msra.mxu0 0.0
    %226 = vmatprep.subr.mxu0 0.0
    %227 = vmatpush1.msra.mxu0 0.0
    %228 = vmatprep.subr.mxu0 0.0
    %229 = vmatpush1.msra.mxu0 0.0
    %230 = vmatprep.subr.mxu0 0.0
    %231 = vmatpush1.msra.mxu0 0.0
    %232 = vmatprep.subr.mxu0 0.0
    %233 = vmatpush1.msra.mxu0 0.0
    %234 = vmatprep.subr.mxu0 0.0
    %235 = vmatpush1.msra.mxu0 0.0
    %236 = vmatprep.subr.mxu0 0.0
    %237 = vmatpush1.msra.mxu0 0.0
    %238 = vmatprep.subr.mxu0 0.0
    %239 = vmatpush1.msra.mxu0 0.0
    %240 = vmatprep.subr.mxu0 0.0
    %241 = vmatpush1.msra.mxu0 0.0
    %242 = vmatprep.subr.mxu0 0.0
    %243 = vmatpush1.msra.mxu0 0.0
    %244 = vmatprep.subr.mxu0 0.0
    %245 = vmatpush1.msra.mxu0 0.0
    %246 = vmatprep.subr.mxu0 0.0
    %247 = vmatpush1.msra.mxu0 0.0
    %248 = vmatprep.subr.mxu0 0.0
    %249 = vmatpush1.msra.mxu0 0.0
    %250 = vmatprep.subr.mxu0 0.0
    %251 = vmatpush1.msra.mxu0 0.0
    %252 = vmatprep.subr.mxu0 0.0
    %253 = vmatpush1.msra.mxu0 0.0
    %254 = vmatprep.mubr.f32.mxu0 0.0
    %255 = vmatmul.mubr.f32.gmra.mrb[0].mxu0 %v172
    %v256 = vpop.f32.mrb[0].mxu0
    %v257 = vadd.f32 %v163, %v256
    %v258 = vpop.f32.mrb[0].mxu0
    %v259 = vadd.f32 %v167, %v258
    %260 = vmatprep.mubr.f32.mxu0 0.0
    %261 = vmatmul.mubr.f32.gmra.mrb[0].mxu0 %v175
    %v262 = vpop.f32.mrb[0].mxu0
    %v263 = vadd.f32 %v163, %v262
    %v264 = vpop.f32.mrb[0].mxu0
    %v265 = vadd.f32 %v167, %v264
    %266 = vmatprep.mubr.f32.mxu0 0.0
    %267 = vmatmul.mubr.f32.gmra.mrb[0].mxu0 %v178
    %v268 = vpop.f32.mrb[0].mxu0
    %v269 = vadd.f32 %v163, %v268
    %v270 = vpop.f32.mrb[0].mxu0
    %v271 = vadd.f32 %v167, %v270
    %272 = vmatprep.mubr.f32.mxu0 0.0
    %273 = vmatmul.mubr.f32.gmra.mrb[0].mxu0 %v181
    %v274 = vpop.f32.mrb[0].mxu0
    %v275 = vadd.f32 %v163, %v274
    %v276 = vpop.f32.mrb[0].mxu0
    %v277 = vadd.f32 %v167, %v276
    %278 = vdwg.mxu0
    %vm279 = vcmask 130048
    %v281 = vsel %vm279, %v44, 0
    %v284 = vsel %vm279, %v45, 0
    %v287 = vsel %vm279, %v46, 0
    %v290 = vsel %vm279, %v47, 0
    %292 = vmatprep.subr.mxu0 0.0
    %293 = vmatpush1.msra.mxu0 %v145
    %294 = vmatprep.subr.mxu0 0.0
    %295 = vmatpush1.msra.mxu0 %v151
    %296 = vmatprep.subr.mxu0 0.0
    %297 = vmatpush1.msra.mxu0 0.0
    %298 = vmatprep.subr.mxu0 0.0
    %299 = vmatpush1.msra.mxu0 0.0
    %300 = vmatprep.subr.mxu0 0.0
    %301 = vmatpush1.msra.mxu0 0.0
    %302 = vmatprep.subr.mxu0 0.0
    %303 = vmatpush1.msra.mxu0 0.0
    %304 = vmatprep.subr.mxu0 0.0
    %305 = vmatpush1.msra.mxu0 0.0
    %306 = vmatprep.subr.mxu0 0.0
    %307 = vmatpush1.msra.mxu0 0.0
    %308 = vmatprep.subr.mxu0 0.0
    %309 = vmatpush1.msra.mxu0 0.0
    %310 = vmatprep.subr.mxu0 0.0
    %311 = vmatpush1.msra.mxu0 0.0
    %312 = vmatprep.subr.mxu0 0.0
    %313 = vmatpush1.msra.mxu0 0.0
    %314 = vmatprep.subr.mxu0 0.0
    %315 = vmatpush1.msra.mxu0 0.0
    %316 = vmatprep.subr.mxu0 0.0
    %317 = vmatpush1.msra.mxu0 0.0
    %318 = vmatprep.subr.mxu0 0.0
    %319 = vmatpush1.msra.mxu0 0.0
    %320 = vmatprep.subr.mxu0 0.0
    %321 = vmatpush1.msra.mxu0 0.0
    %322 = vmatprep.subr.mxu0 0.0
    %323 = vmatpush1.msra.mxu0 0.0
    %324 = vmatprep.subr.mxu0 0.0
    %325 = vmatpush1.msra.mxu0 0.0
    %326 = vmatprep.subr.mxu0 0.0
    %327 = vmatpush1.msra.mxu0 0.0
    %328 = vmatprep.subr.mxu0 0.0
    %329 = vmatpush1.msra.mxu0 0.0
    %330 = vmatprep.subr.mxu0 0.0
    %331 = vmatpush1.msra.mxu0 0.0
    %332 = vmatprep.subr.mxu0 0.0
    %333 = vmatpush1.msra.mxu0 0.0
    %334 = vmatprep.subr.mxu0 0.0
    %335 = vmatpush1.msra.mxu0 0.0
    %336 = vmatprep.subr.mxu0 0.0
    %337 = vmatpush1.msra.mxu0 0.0
    %338 = vmatprep.subr.mxu0 0.0
    %339 = vmatpush1.msra.mxu0 0.0
    %340 = vmatprep.subr.mxu0 0.0
    %341 = vmatpush1.msra.mxu0 0.0
    %342 = vmatprep.subr.mxu0 0.0
    %343 = vmatpush1.msra.mxu0 0.0
    %344 = vmatprep.subr.mxu0 0.0
    %345 = vmatpush1.msra.mxu0 0.0
    %346 = vmatprep.subr.mxu0 0.0
    %347 = vmatpush1.msra.mxu0 0.0
    %348 = vmatprep.subr.mxu0 0.0
    %349 = vmatpush1.msra.mxu0 0.0
    %350 = vmatprep.subr.mxu0 0.0
    %351 = vmatpush1.msra.mxu0 0.0
    %352 = vmatprep.subr.mxu0 0.0
    %353 = vmatpush1.msra.mxu0 0.0
    %354 = vmatprep.subr.mxu0 0.0
    %355 = vmatpush1.msra.mxu0 0.0
    %356 = vmatprep.mubr.f32.mxu0 0.0
    %357 = vmatmul.mubr.f32.gmra.mrb[0].mxu0 %v281
    %v358 = vpop.f32.mrb[0].mxu0
    %v359 = vadd.f32 %v257, %v358
    %v360 = vpop.f32.mrb[0].mxu0
    %361 = vmatprep.mubr.f32.mxu0 0.0
    %362 = vmatmul.mubr.f32.gmra.mrb[0].mxu0 %v284
    %v363 = vpop.f32.mrb[0].mxu0
    %v364 = vadd.f32 %v263, %v363
    %v365 = vpop.f32.mrb[0].mxu0
    %366 = vmatprep.mubr.f32.mxu0 0.0
    %367 = vmatmul.mubr.f32.gmra.mrb[0].mxu0 %v287
    %v368 = vpop.f32.mrb[0].mxu0
    %v369 = vadd.f32 %v269, %v368
    %v370 = vpop.f32.mrb[0].mxu0
    %371 = vmatprep.mubr.f32.mxu0 0.0
    %372 = vmatmul.mubr.f32.gmra.mrb[0].mxu0 %v290
    %v373 = vpop.f32.mrb[0].mxu0
    %v374 = vadd.f32 %v275, %v373
    %v375 = vpop.f32.mrb[0].mxu0
    %376 = vdwg.mxu0
    %v377 = vmax.f32 %v359, 0.0
    %v378 = vmax.f32 %v364, 0.0
    %v379 = vmax.f32 %v369, 0.0
    %v380 = vmax.f32 %v374, 0.0
    %v381 = vadd.f32 %v377, 1e-07
    %v382 = vadd.f32 %v378, 1e-07
    %v383 = vadd.f32 %v379, 1e-07
    %v384 = vadd.f32 %v380, 1e-07
    %v385 = vmax.f32 %v381, %v382
    %v386 = vmax.f32 %v383, %v384
    %v387 = vmax.f32 %v385, %v386
    %v388 = vrot.slane %v387, 4
    %v389 = vmax.f32 %v387, %v388
    %v390 = vrot.slane %v389, 2
    %v391 = vmax.f32 %v389, %v390
    %v392 = vrot.slane %v391, 1
    %v393 = vmax.f32 %v391, %v392
    %v394 = vsub.f32 %v381, %v393
    %v395 = vsub.f32 %v382, %v393
    %v396 = vsub.f32 %v383, %v393
    %v397 = vsub.f32 %v384, %v393
    %v398 = vmul.f32 %v394, 1.442695
    %v399 = vpow.pop %v398
    %v400 = vmul.f32 %v395, 1.442695
    %v401 = vpow.pop %v400
    %v402 = vmul.f32 %v396, 1.442695
    %v403 = vpow.pop %v402
    %v404 = vmul.f32 %v397, 1.442695
    %v405 = vpow.pop %v404
    %v406 = vmul.f32 %v399, %v381
    %v407 = vmul.f32 %v401, %v382
    %v408 = vmul.f32 %v403, %v383
    %v409 = vmul.f32 %v405, %v384
    %410 = vxpose.xlu0.b32.start [1/16] %v48, 128
    %411 = vxpose.xlu0.b32.cont [2/16] %v49, 128
    %412 = vxpose.xlu0.b32.cont [3/16] %v50, 128
    %413 = vxpose.xlu0.b32.cont [4/16] %v51, 128
    %414 = vxpose.xlu0.b32.cont [5/16] 0.0, 128
    %415 = vxpose.xlu0.b32.cont [6/16] 0.0, 128
    %416 = vxpose.xlu0.b32.cont [7/16] 0.0, 128
    %417 = vxpose.xlu0.b32.cont [8/16] 0.0, 128
    %418 = vxpose.xlu0.b32.cont [9/16] 0.0, 128
    %419 = vxpose.xlu0.b32.cont [10/16] 0.0, 128
    %420 = vxpose.xlu0.b32.cont [11/16] 0.0, 128
    %421 = vxpose.xlu0.b32.cont [12/16] 0.0, 128
    %422 = vxpose.xlu0.b32.cont [13/16] 0.0, 128
    %423 = vxpose.xlu0.b32.cont [14/16] 0.0, 128
    %424 = vxpose.xlu0.b32.cont [15/16] 0.0, 128
    %425 = vxpose.xlu0.b32.end [16/16] 0.0, 128
    %v426 = vpop.trf.xlu0
    %v427 = vpop.trf.xlu0
    %v428 = vpop.trf.xlu0
    %v429 = vpop.trf.xlu0
    %v430 = vpop.trf.xlu0
    %v431 = vpop.trf.xlu0
    %v432 = vpop.trf.xlu0
    %v433 = vpop.trf.xlu0
    %v434 = vpop.trf.xlu0
    %v435 = vpop.trf.xlu0
    %v436 = vpop.trf.xlu0
    %v437 = vpop.trf.xlu0
    %v438 = vpop.trf.xlu0
    %v439 = vpop.trf.xlu0
    %v440 = vpop.trf.xlu0
    %v441 = vpop.trf.xlu0
    %vm442 = vcmask 261120
    %v444 = vsel %vm442, %v426, 0
    %v447 = vsel %vm442, %v427, 0
    %449 = vmatprep.subr.mxu0 %v406
    %450 = vmatpush1.msra.mxu0 %v399
    %451 = vmatprep.subr.mxu0 %v407
    %452 = vmatpush1.msra.mxu0 %v401
    %453 = vmatprep.subr.mxu0 %v408
    %454 = vmatpush1.msra.mxu0 %v403
    %455 = vmatprep.subr.mxu0 %v409
    %456 = vmatpush1.msra.mxu0 %v405
    %457 = vmatprep.subr.mxu0 0.0
    %458 = vmatpush1.msra.mxu0 0.0
    %459 = vmatprep.subr.mxu0 0.0
    %460 = vmatpush1.msra.mxu0 0.0
    %461 = vmatprep.subr.mxu0 0.0
    %462 = vmatpush1.msra.mxu0 0.0
    %463 = vmatprep.subr.mxu0 0.0
    %464 = vmatpush1.msra.mxu0 0.0
    %465 = vmatprep.subr.mxu0 0.0
    %466 = vmatpush1.msra.mxu0 0.0
    %467 = vmatprep.subr.mxu0 0.0
    %468 = vmatpush1.msra.mxu0 0.0
    %469 = vmatprep.subr.mxu0 0.0
    %470 = vmatpush1.msra.mxu0 0.0
    %471 = vmatprep.subr.mxu0 0.0
    %472 = vmatpush1.msra.mxu0 0.0
    %473 = vmatprep.subr.mxu0 0.0
    %474 = vmatpush1.msra.mxu0 0.0
    %475 = vmatprep.subr.mxu0 0.0
    %476 = vmatpush1.msra.mxu0 0.0
    %477 = vmatprep.subr.mxu0 0.0
    %478 = vmatpush1.msra.mxu0 0.0
    %479 = vmatprep.subr.mxu0 0.0
    %480 = vmatpush1.msra.mxu0 0.0
    %481 = vmatprep.subr.mxu0 0.0
    %482 = vmatpush1.msra.mxu0 0.0
    %483 = vmatprep.subr.mxu0 0.0
    %484 = vmatpush1.msra.mxu0 0.0
    %485 = vmatprep.subr.mxu0 0.0
    %486 = vmatpush1.msra.mxu0 0.0
    %487 = vmatprep.subr.mxu0 0.0
    %488 = vmatpush1.msra.mxu0 0.0
    %489 = vmatprep.subr.mxu0 0.0
    %490 = vmatpush1.msra.mxu0 0.0
    %491 = vmatprep.subr.mxu0 0.0
    %492 = vmatpush1.msra.mxu0 0.0
    %493 = vmatprep.subr.mxu0 0.0
    %494 = vmatpush1.msra.mxu0 0.0
    %495 = vmatprep.subr.mxu0 0.0
    %496 = vmatpush1.msra.mxu0 0.0
    %497 = vmatprep.subr.mxu0 0.0
    %498 = vmatpush1.msra.mxu0 0.0
    %499 = vmatprep.subr.mxu0 0.0
    %500 = vmatpush1.msra.mxu0 0.0
    %501 = vmatprep.subr.mxu0 0.0
    %502 = vmatpush1.msra.mxu0 0.0
    %503 = vmatprep.subr.mxu0 0.0
    %504 = vmatpush1.msra.mxu0 0.0
    %505 = vmatprep.subr.mxu0 0.0
    %506 = vmatpush1.msra.mxu0 0.0
    %507 = vmatprep.subr.mxu0 0.0
    %508 = vmatpush1.msra.mxu0 0.0
    %509 = vmatprep.subr.mxu0 0.0
    %510 = vmatpush1.msra.mxu0 0.0
    %511 = vmatprep.subr.mxu0 0.0
    %512 = vmatpush1.msra.mxu0 0.0
    %513 = vmatprep.mubr.f32.mxu0 0.0
    %514 = vmatmul.mubr.f32.gmra.mrb[0].mxu0 %v444
    %v515 = vpop.f32.mrb[0].mxu0
    %v516 = vadd.f32 0.0, %v515
    %v517 = vpop.f32.mrb[0].mxu0
    %v518 = vadd.f32 0.0, %v517
    %519 = vmatprep.mubr.f32.mxu0 0.0
    %520 = vmatmul.mubr.f32.gmra.mrb[0].mxu0 %v447
    %v521 = vpop.f32.mrb[0].mxu0
    %v522 = vadd.f32 0.0, %v521
    %v523 = vpop.f32.mrb[0].mxu0
    %v524 = vadd.f32 0.0, %v523
    %525 = vdwg.mxu0
    %vm526 = vcmp.gt.f32.partialorder %v516, 0.0
    %vm527 = vcmp.gt.f32.partialorder %v522, 0.0
    %v528 = vsel %vm526, %v516, 1.0
    %v529 = vsel %vm527, %v522, 1.0
    %v530 = vrcp.pop %v528
    %v531 = vmul.f32 1.0, %v530
    %v532 = vrcp.pop %v529
    %v533 = vmul.f32 1.0, %v532
    %v534 = vmul.f32 %v518, %v531
    %v535 = vmul.f32 %v524, %v533
    %v536 = vsel %vm54, 1, 0
    %v537 = vsel %vm55, 1, 0
    %538 = vset.pattern.permute.xlu0 0
    %539 = vperm.xlu0 %538, %v536
    %v540 = vpop.permute.xlu0 %539
    %541 = vset.pattern.permute.xlu0 0
    %542 = vperm.xlu0 %541, %v537
    %v543 = vpop.permute.xlu0 %542
    %vm544 = vcmp.eq.s32.totalorder %v540, 1
    %vm545 = vcmp.eq.s32.totalorder %v543, 1
    %v546 = vsel %vm544, %v534, 0.0
    %v547 = vsel %vm545, %v535, 0.0
    %v548 = vadd.f32 %v546, %v147
    %v549 = vadd.f32 %v547, %v153
    %v550 = vld [vmem:[#allocation2 + $0x40] sm:$0xff]
    %v551 = vld [vmem:[#allocation2 + $0x50] sm:$0xff]
    %v552 = vld [vmem:[#allocation2 + $0x60] sm:$0xff]
    %v553 = vld [vmem:[#allocation2 + $0x70] sm:$0xff]
    %v554 = vld [vmem:[#allocation2 + $0x80] sm:$0xff]
    %v555 = vld [vmem:[#allocation2 + $0x90] sm:$0xff]
    %v556 = vld [vmem:[#allocation2 + $0xa0] sm:$0xff]
    %v557 = vld [vmem:[#allocation2 + $0xb0] sm:$0xff]
    %v558 = vld [vmem:[#allocation2 + $0xc0] sm:$0xff]
    %v559 = vld [vmem:[#allocation2 + $0xd0] sm:$0xff]
    %v560 = vld [vmem:[#allocation2 + $0xe0] sm:$0xff]
    %v561 = vld [vmem:[#allocation2 + $0xf0] sm:$0xff]
    %v562 = vld [vmem:[#allocation2 + $0x100] sm:$0xff]
    %v563 = vld [vmem:[#allocation2 + $0x110] sm:$0xff]
    %v564 = vld [vmem:[#allocation2 + $0x120] sm:$0xff]
    %v565 = vld [vmem:[#allocation2 + $0x130] sm:$0xff]
    %v566 = vld [vmem:[#allocation2 + $0x140] ss:$0 sm:$0xff]
    %567 = vmatprep.subr.mxu0 0.0
    %568 = vmatpush1.msra.mxu0 %v550
    %569 = vmatprep.subr.mxu0 0.0
    %570 = vmatpush1.msra.mxu0 %v551
    %571 = vmatprep.subr.mxu0 0.0
    %572 = vmatpush1.msra.mxu0 %v552
    %573 = vmatprep.subr.mxu0 0.0
    %574 = vmatpush1.msra.mxu0 %v553
    %575 = vmatprep.subr.mxu0 0.0
    %576 = vmatpush1.msra.mxu0 %v554
    %577 = vmatprep.subr.mxu0 0.0
    %578 = vmatpush1.msra.mxu0 %v555
    %579 = vmatprep.subr.mxu0 0.0
    %580 = vmatpush1.msra.mxu0 %v556
    %581 = vmatprep.subr.mxu0 0.0
    %582 = vmatpush1.msra.mxu0 %v557
    %583 = vmatprep.subr.mxu0 0.0
    %584 = vmatpush1.msra.mxu0 %v558
    %585 = vmatprep.subr.mxu0 0.0
    %586 = vmatpush1.msra.mxu0 %v559
    %587 = vmatprep.subr.mxu0 0.0
    %588 = vmatpush1.msra.mxu0 %v560
    %589 = vmatprep.subr.mxu0 0.0
    %590 = vmatpush1.msra.mxu0 %v561
    %591 = vmatprep.subr.mxu0 0.0
    %592 = vmatpush1.msra.mxu0 %v562
    %593 = vmatprep.subr.mxu0 0.0
    %594 = vmatpush1.msra.mxu0 %v563
    %595 = vmatprep.subr.mxu0 0.0
    %596 = vmatpush1.msra.mxu0 %v564
    %597 = vmatprep.subr.mxu0 0.0
    %598 = vmatpush1.msra.mxu0 %v565
    %599 = vmatprep.subr.mxu0 0.0
    %600 = vmatpush1.msra.mxu0 0.0
    %601 = vmatprep.subr.mxu0 0.0
    %602 = vmatpush1.msra.mxu0 0.0
    %603 = vmatprep.subr.mxu0 0.0
    %604 = vmatpush1.msra.mxu0 0.0
    %605 = vmatprep.subr.mxu0 0.0
    %606 = vmatpush1.msra.mxu0 0.0
    %607 = vmatprep.subr.mxu0 0.0
    %608 = vmatpush1.msra.mxu0 0.0
    %609 = vmatprep.subr.mxu0 0.0
    %610 = vmatpush1.msra.mxu0 0.0
    %611 = vmatprep.subr.mxu0 0.0
    %612 = vmatpush1.msra.mxu0 0.0
    %613 = vmatprep.subr.mxu0 0.0
    %614 = vmatpush1.msra.mxu0 0.0
    %615 = vmatprep.subr.mxu0 0.0
    %616 = vmatpush1.msra.mxu0 0.0
    %617 = vmatprep.subr.mxu0 0.0
    %618 = vmatpush1.msra.mxu0 0.0
    %619 = vmatprep.subr.mxu0 0.0
    %620 = vmatpush1.msra.mxu0 0.0
    %621 = vmatprep.subr.mxu0 0.0
    %622 = vmatpush1.msra.mxu0 0.0
    %623 = vmatprep.subr.mxu0 0.0
    %624 = vmatpush1.msra.mxu0 0.0
    %625 = vmatprep.subr.mxu0 0.0
    %626 = vmatpush1.msra.mxu0 0.0
    %627 = vmatprep.subr.mxu0 0.0
    %628 = vmatpush1.msra.mxu0 0.0
    %629 = vmatprep.subr.mxu0 0.0
    %630 = vmatpush1.msra.mxu0 0.0
    %631 = vmatprep.mubr.f32.mxu0 0.0
    %632 = vmatmul.mubr.f32.gmra.mrb[0].mxu0 %v548
    %v633 = vpop.f32.mrb[0].mxu0
    %v634 = vadd.f32 %v566, %v633
    %v635 = vpop.f32.mrb[0].mxu0
    %636 = vmatprep.mubr.f32.mxu0 0.0
    %637 = vmatmul.mubr.f32.gmra.mrb[0].mxu0 %v549
    %v638 = vpop.f32.mrb[0].mxu0
    %v639 = vadd.f32 %v566, %v638
    %v640 = vpop.f32.mrb[0].mxu0
    %641 = vdwg.mxu0
    %v642 = vadd.f32 %v634, %v639
    %v643 = vrot.slane %v642, 4
    %v644 = vadd.f32 %v642, %v643
    %v645 = vrot.slane %v644, 2
    %v646 = vadd.f32 %v644, %v645
    %v647 = vrot.slane %v646, 1
    %v648 = vadd.f32 %v646, %v647
    %v649 = vmul.f32 %v648, 0.0625
    %v650 = vmul.f32 %v634, %v634
    %v651 = vmul.f32 %v639, %v639
    %v652 = vadd.f32 %v650, %v651
    %v653 = vrot.slane %v652, 4
    %v654 = vadd.f32 %v652, %v653
    %v655 = vrot.slane %v654, 2
    %v656 = vadd.f32 %v654, %v655
    %v657 = vrot.slane %v656, 1
    %v658 = vadd.f32 %v656, %v657
    %v659 = vmul.f32 %v658, 0.0625
    %v660 = vmul.f32 %v649, %v649
    %v661 = vsub.f32 %v659, %v660
    %v662 = vmax.f32 %v661, 0.0
    %v663 = vsub.f32 %v634, %v649
    %v664 = vsub.f32 %v639, %v649
    %v665 = vadd.f32 %v662, 1e-05
    %v666 = vrsqrt.pop %v665
    %v667 = vmul.f32 %v663, %v666
    %v668 = vmul.f32 %v664, %v666
    %v669 = vld [vmem:[#allocation2 + $0x150] ss:$0 sm:$0xff]
    %v670 = vmul.f32 %v667, %v669
    %v671 = vmul.f32 %v668, %v669
    %v672 = vld [vmem:[#allocation2 + $0x160] ss:$0 sm:$0xff]
    %v673 = vadd.f32 %v670, %v672
    %v674 = vadd.f32 %v671, %v672
    %v675 = vmax.f32 %v673, 0.0
    %v676 = vmax.f32 %v674, 0.0
    %v677 = vld [vmem:[#allocation2 + $0x170] sm:$0xff]
    %v678 = vld [vmem:[#allocation2 + $0x180] sm:$0xff]
    %v679 = vld [vmem:[#allocation2 + $0x190] sm:$0xff]
    %v680 = vld [vmem:[#allocation2 + $0x1a0] sm:$0xff]
    %v681 = vld [vmem:[#allocation2 + $0x1b0] sm:$0xff]
    %v682 = vld [vmem:[#allocation2 + $0x1c0] sm:$0xff]
    %v683 = vld [vmem:[#allocation2 + $0x1d0] sm:$0xff]
    %v684 = vld [vmem:[#allocation2 + $0x1e0] sm:$0xff]
    %v685 = vld [vmem:[#allocation2 + $0x1f0] sm:$0xff]
    %v686 = vld [vmem:[#allocation2 + $0x200] sm:$0xff]
    %v687 = vld [vmem:[#allocation2 + $0x210] sm:$0xff]
    %v688 = vld [vmem:[#allocation2 + $0x220] sm:$0xff]
    %v689 = vld [vmem:[#allocation2 + $0x230] sm:$0xff]
    %v690 = vld [vmem:[#allocation2 + $0x240] sm:$0xff]
    %v691 = vld [vmem:[#allocation2 + $0x250] sm:$0xff]
    %v692 = vld [vmem:[#allocation2 + $0x260] sm:$0xff]
    %v693 = vld [vmem:[#allocation2 + $0x270] ss:$0 sm:$0xff]
    %694 = vmatprep.subr.mxu0 0.0
    %695 = vmatpush1.msra.mxu0 %v677
    %696 = vmatprep.subr.mxu0 0.0
    %697 = vmatpush1.msra.mxu0 %v678
    %698 = vmatprep.subr.mxu0 0.0
    %699 = vmatpush1.msra.mxu0 %v679
    %700 = vmatprep.subr.mxu0 0.0
    %701 = vmatpush1.msra.mxu0 %v680
    %702 = vmatprep.subr.mxu0 0.0
    %703 = vmatpush1.msra.mxu0 %v681
    %704 = vmatprep.subr.mxu0 0.0
    %705 = vmatpush1.msra.mxu0 %v682
    %706 = vmatprep.subr.mxu0 0.0
    %707 = vmatpush1.msra.mxu0 %v683
    %708 = vmatprep.subr.mxu0 0.0
    %709 = vmatpush1.msra.mxu0 %v684
    %710 = vmatprep.subr.mxu0 0.0
    %711 = vmatpush1.msra.mxu0 %v685
    %712 = vmatprep.subr.mxu0 0.0
    %713 = vmatpush1.msra.mxu0 %v686
    %714 = vmatprep.subr.mxu0 0.0
    %715 = vmatpush1.msra.mxu0 %v687
    %716 = vmatprep.subr.mxu0 0.0
    %717 = vmatpush1.msra.mxu0 %v688
    %718 = vmatprep.subr.mxu0 0.0
    %719 = vmatpush1.msra.mxu0 %v689
    %720 = vmatprep.subr.mxu0 0.0
    %721 = vmatpush1.msra.mxu0 %v690
    %722 = vmatprep.subr.mxu0 0.0
    %723 = vmatpush1.msra.mxu0 %v691
    %724 = vmatprep.subr.mxu0 0.0
    %725 = vmatpush1.msra.mxu0 %v692
    %726 = vmatprep.subr.mxu0 0.0
    %727 = vmatpush1.msra.mxu0 0.0
    %728 = vmatprep.subr.mxu0 0.0
    %729 = vmatpush1.msra.mxu0 0.0
    %730 = vmatprep.subr.mxu0 0.0
    %731 = vmatpush1.msra.mxu0 0.0
    %732 = vmatprep.subr.mxu0 0.0
    %733 = vmatpush1.msra.mxu0 0.0
    %734 = vmatprep.subr.mxu0 0.0
    %735 = vmatpush1.msra.mxu0 0.0
    %736 = vmatprep.subr.mxu0 0.0
    %737 = vmatpush1.msra.mxu0 0.0
    %738 = vmatprep.subr.mxu0 0.0
    %739 = vmatpush1.msra.mxu0 0.0
    %740 = vmatprep.subr.mxu0 0.0
    %741 = vmatpush1.msra.mxu0 0.0
    %742 = vmatprep.subr.mxu0 0.0
    %743 = vmatpush1.msra.mxu0 0.0
    %744 = vmatprep.subr.mxu0 0.0
    %745 = vmatpush1.msra.mxu0 0.0
    %746 = vmatprep.subr.mxu0 0.0
    %747 = vmatpush1.msra.mxu0 0.0
    %748 = vmatprep.subr.mxu0 0.0
    %749 = vmatpush1.msra.mxu0 0.0
    %750 = vmatprep.subr.mxu0 0.0
    %751 = vmatpush1.msra.mxu0 0.0
    %752 = vmatprep.subr.mxu0 0.0
    %753 = vmatpush1.msra.mxu0 0.0
    %754 = vmatprep.subr.mxu0 0.0
    %755 = vmatpush1.msra.mxu0 0.0
    %756 = vmatprep.subr.mxu0 0.0
    %757 = vmatpush1.msra.mxu0 0.0
    %758 = vmatprep.mubr.f32.mxu0 0.0
    %759 = vmatmul.mubr.f32.gmra.mrb[0].mxu0 %v675
    %v760 = vpop.f32.mrb[0].mxu0
    %v761 = vadd.f32 %v693, %v760
    %v762 = vpop.f32.mrb[0].mxu0
    %763 = vmatprep.mubr.f32.mxu0 0.0
    %764 = vmatmul.mubr.f32.gmra.mrb[0].mxu0 %v676
    %v765 = vpop.f32.mrb[0].mxu0
    %v766 = vadd.f32 %v693, %v765
    %v767 = vpop.f32.mrb[0].mxu0
    %768 = vdwg.mxu0
    %v769 = vmax.f32 %v761, 0.0
    %v770 = vmax.f32 %v766, 0.0
    %771 = vmatprep.subr.mxu0 0.0
    %772 = vmatpush1.msra.mxu0 %v769
    %773 = vmatprep.subr.mxu0 0.0
    %774 = vmatpush1.msra.mxu0 %v770
    %775 = vmatprep.subr.mxu0 0.0
    %776 = vmatpush1.msra.mxu0 0.0
    %777 = vmatprep.subr.mxu0 0.0
    %778 = vmatpush1.msra.mxu0 0.0
    %779 = vmatprep.subr.mxu0 0.0
    %780 = vmatpush1.msra.mxu0 0.0
    %781 = vmatprep.subr.mxu0 0.0
    %782 = vmatpush1.msra.mxu0 0.0
    %783 = vmatprep.subr.mxu0 0.0
    %784 = vmatpush1.msra.mxu0 0.0
    %785 = vmatprep.subr.mxu0 0.0
    %786 = vmatpush1.msra.mxu0 0.0
    %787 = vmatprep.subr.mxu0 0.0
    %788 = vmatpush1.msra.mxu0 0.0
    %789 = vmatprep.subr.mxu0 0.0
    %790 = vmatpush1.msra.mxu0 0.0
    %791 = vmatprep.subr.mxu0 0.0
    %792 = vmatpush1.msra.mxu0 0.0
    %793 = vmatprep.subr.mxu0 0.0
    %794 = vmatpush1.msra.mxu0 0.0
    %795 = vmatprep.subr.mxu0 0.0
    %796 = vmatpush1.msra.mxu0 0.0
    %797 = vmatprep.subr.mxu0 0.0
    %798 = vmatpush1.msra.mxu0 0.0
    %799 = vmatprep.subr.mxu0 0.0
    %800 = vmatpush1.msra.mxu0 0.0
    %801 = vmatprep.subr.mxu0 0.0
    %802 = vmatpush1.msra.mxu0 0.0
    %803 = vmatprep.subr.mxu0 0.0
    %804 = vmatpush1.msra.mxu0 0.0
    %805 = vmatprep.subr.mxu0 0.0
    %806 = vmatpush1.msra.mxu0 0.0
    %807 = vmatprep.subr.mxu0 0.0
    %808 = vmatpush1.msra.mxu0 0.0
    %809 = vmatprep.subr.mxu0 0.0
    %810 = vmatpush1.msra.mxu0 0.0
    %811 = vmatprep.subr.mxu0 0.0
    %812 = vmatpush1.msra.mxu0 0.0
    %813 = vmatprep.subr.mxu0 0.0
    %814 = vmatpush1.msra.mxu0 0.0
    %815 = vmatprep.subr.mxu0 0.0
    %816 = vmatpush1.msra.mxu0 0.0
    %817 = vmatprep.subr.mxu0 0.0
    %818 = vmatpush1.msra.mxu0 0.0
    %819 = vmatprep.subr.mxu0 0.0
    %820 = vmatpush1.msra.mxu0 0.0
    %821 = vmatprep.subr.mxu0 0.0
    %822 = vmatpush1.msra.mxu0 0.0
    %823 = vmatprep.subr.mxu0 0.0
    %824 = vmatpush1.msra.mxu0 0.0
    %825 = vmatprep.subr.mxu0 0.0
    %826 = vmatpush1.msra.mxu0 0.0
    %827 = vmatprep.subr.mxu0 0.0
    %828 = vmatpush1.msra.mxu0 0.0
    %829 = vmatprep.subr.mxu0 0.0
    %830 = vmatpush1.msra.mxu0 0.0
    %831 = vmatprep.subr.mxu0 0.0
    %832 = vmatpush1.msra.mxu0 0.0
    %833 = vmatprep.subr.mxu0 0.0
    %834 = vmatpush1.msra.mxu0 0.0
    %835 = vmatprep.mubr.f32.mxu0 0.0
    %836 = vmatmul.mubr.f32.gmra.mrb[0].mxu0 %v281
    %v837 = vpop.f32.mrb[0].mxu0
    %v838 = vadd.f32 %v259, %v837
    %v839 = vpop.f32.mrb[0].mxu0
    %840 = vmatprep.mubr.f32.mxu0 0.0
    %841 = vmatmul.mubr.f32.gmra.mrb[0].mxu0 %v284
    %v842 = vpop.f32.mrb[0].mxu0
    %v843 = vadd.f32 %v265, %v842
    %v844 = vpop.f32.mrb[0].mxu0
    %845 = vmatprep.mubr.f32.mxu0 0.0
    %846 = vmatmul.mubr.f32.gmra.mrb[0].mxu0 %v287
    %v847 = vpop.f32.mrb[0].mxu0
    %v848 = vadd.f32 %v271, %v847
    %v849 = vpop.f32.mrb[0].mxu0
    %850 = vmatprep.mubr.f32.mxu0 0.0
    %851 = vmatmul.mubr.f32.gmra.mrb[0].mxu0 %v290
    %v852 = vpop.f32.mrb[0].mxu0
    %v853 = vadd.f32 %v277, %v852
    %v854 = vpop.f32.mrb[0].mxu0
    %855 = vdwg.mxu0
    %v856 = vmax.f32 %v838, 0.0
    %v857 = vmax.f32 %v843, 0.0
    %v858 = vmax.f32 %v848, 0.0
    %v859 = vmax.f32 %v853, 0.0
    %v860 = vadd.f32 %v856, 1e-07
    %v861 = vadd.f32 %v857, 1e-07
    %v862 = vadd.f32 %v858, 1e-07
    %v863 = vadd.f32 %v859, 1e-07
    %v864 = vmax.f32 %v860, %v861
    %v865 = vmax.f32 %v862, %v863
    %v866 = vmax.f32 %v864, %v865
    %v867 = vrot.slane %v866, 4
    %v868 = vmax.f32 %v866, %v867
    %v869 = vrot.slane %v868, 2
    %v870 = vmax.f32 %v868, %v869
    %v871 = vrot.slane %v870, 1
    %v872 = vmax.f32 %v870, %v871
    %v873 = vsub.f32 %v860, %v872
    %v874 = vsub.f32 %v861, %v872
    %v875 = vsub.f32 %v862, %v872
    %v876 = vsub.f32 %v863, %v872
    %v877 = vmul.f32 %v873, 1.442695
    %v878 = vpow.pop %v877
    %v879 = vmul.f32 %v874, 1.442695
    %v880 = vpow.pop %v879
    %v881 = vmul.f32 %v875, 1.442695
    %v882 = vpow.pop %v881
    %v883 = vmul.f32 %v876, 1.442695
    %v884 = vpow.pop %v883
    %v885 = vmul.f32 %v878, %v860
    %v886 = vmul.f32 %v880, %v861
    %v887 = vmul.f32 %v882, %v862
    %v888 = vmul.f32 %v884, %v863
    %889 = vmatprep.subr.mxu0 %v885
    %890 = vmatpush1.msra.mxu0 %v878
    %891 = vmatprep.subr.mxu0 %v886
    %892 = vmatpush1.msra.mxu0 %v880
    %893 = vmatprep.subr.mxu0 %v887
    %894 = vmatpush1.msra.mxu0 %v882
    %895 = vmatprep.subr.mxu0 %v888
    %896 = vmatpush1.msra.mxu0 %v884
    %897 = vmatprep.subr.mxu0 0.0
    %898 = vmatpush1.msra.mxu0 0.0
    %899 = vmatprep.subr.mxu0 0.0
    %900 = vmatpush1.msra.mxu0 0.0
    %901 = vmatprep.subr.mxu0 0.0
    %902 = vmatpush1.msra.mxu0 0.0
    %903 = vmatprep.subr.mxu0 0.0
    %904 = vmatpush1.msra.mxu0 0.0
    %905 = vmatprep.subr.mxu0 0.0
    %906 = vmatpush1.msra.mxu0 0.0
    %907 = vmatprep.subr.mxu0 0.0
    %908 = vmatpush1.msra.mxu0 0.0
    %909 = vmatprep.subr.mxu0 0.0
    %910 = vmatpush1.msra.mxu0 0.0
    %911 = vmatprep.subr.mxu0 0.0
    %912 = vmatpush1.msra.mxu0 0.0
    %913 = vmatprep.subr.mxu0 0.0
    %914 = vmatpush1.msra.mxu0 0.0
    %915 = vmatprep.subr.mxu0 0.0
    %916 = vmatpush1.msra.mxu0 0.0
    %917 = vmatprep.subr.mxu0 0.0
    %918 = vmatpush1.msra.mxu0 0.0
    %919 = vmatprep.subr.mxu0 0.0
    %920 = vmatpush1.msra.mxu0 0.0
    %921 = vmatprep.subr.mxu0 0.0
    %922 = vmatpush1.msra.mxu0 0.0
    %923 = vmatprep.subr.mxu0 0.0
    %924 = vmatpush1.msra.mxu0 0.0
    %925 = vmatprep.subr.mxu0 0.0
    %926 = vmatpush1.msra.mxu0 0.0
    %927 = vmatprep.subr.mxu0 0.0
    %928 = vmatpush1.msra.mxu0 0.0
    %929 = vmatprep.subr.mxu0 0.0
    %930 = vmatpush1.msra.mxu0 0.0
    %931 = vmatprep.subr.mxu0 0.0
    %932 = vmatpush1.msra.mxu0 0.0
    %933 = vmatprep.subr.mxu0 0.0
    %934 = vmatpush1.msra.mxu0 0.0
    %935 = vmatprep.subr.mxu0 0.0
    %936 = vmatpush1.msra.mxu0 0.0
    %937 = vmatprep.subr.mxu0 0.0
    %938 = vmatpush1.msra.mxu0 0.0
    %939 = vmatprep.subr.mxu0 0.0
    %940 = vmatpush1.msra.mxu0 0.0
    %941 = vmatprep.subr.mxu0 0.0
    %942 = vmatpush1.msra.mxu0 0.0
    %943 = vmatprep.subr.mxu0 0.0
    %944 = vmatpush1.msra.mxu0 0.0
    %945 = vmatprep.subr.mxu0 0.0
    %946 = vmatpush1.msra.mxu0 0.0
    %947 = vmatprep.subr.mxu0 0.0
    %948 = vmatpush1.msra.mxu0 0.0
    %949 = vmatprep.subr.mxu0 0.0
    %950 = vmatpush1.msra.mxu0 0.0
    %951 = vmatprep.subr.mxu0 0.0
    %952 = vmatpush1.msra.mxu0 0.0
    %953 = vmatprep.mubr.f32.mxu0 0.0
    %954 = vmatmul.mubr.f32.gmra.mrb[0].mxu0 %v444
    %v955 = vpop.f32.mrb[0].mxu0
    %v956 = vadd.f32 0.0, %v955
    %v957 = vpop.f32.mrb[0].mxu0
    %v958 = vadd.f32 0.0, %v957
    %959 = vmatprep.mubr.f32.mxu0 0.0
    %960 = vmatmul.mubr.f32.gmra.mrb[0].mxu0 %v447
    %v961 = vpop.f32.mrb[0].mxu0
    %v962 = vadd.f32 0.0, %v961
    %v963 = vpop.f32.mrb[0].mxu0
    %v964 = vadd.f32 0.0, %v963
    %965 = vdwg.mxu0
    %vm966 = vcmp.gt.f32.partialorder %v956, 0.0
    %vm967 = vcmp.gt.f32.partialorder %v962, 0.0
    %v968 = vsel %vm966, %v956, 1.0
    %v969 = vsel %vm967, %v962, 1.0
    %v970 = vrcp.pop %v968
    %v971 = vmul.f32 1.0, %v970
    %v972 = vrcp.pop %v969
    %v973 = vmul.f32 1.0, %v972
    %v974 = vmul.f32 %v958, %v971
    %v975 = vmul.f32 %v964, %v973
    %v976 = vsel %vm544, %v974, 0.0
    %v977 = vsel %vm545, %v975, 0.0
    %v978 = vadd.f32 %v976, %v769
    %v979 = vadd.f32 %v977, %v770
    %v980 = vld [vmem:[#allocation2 + $0x280] sm:$0xff]
    %v981 = vld [vmem:[#allocation2 + $0x290] sm:$0xff]
    %v982 = vld [vmem:[#allocation2 + $0x2a0] sm:$0xff]
    %v983 = vld [vmem:[#allocation2 + $0x2b0] sm:$0xff]
    %v984 = vld [vmem:[#allocation2 + $0x2c0] sm:$0xff]
    %v985 = vld [vmem:[#allocation2 + $0x2d0] sm:$0xff]
    %v986 = vld [vmem:[#allocation2 + $0x2e0] sm:$0xff]
    %v987 = vld [vmem:[#allocation2 + $0x2f0] sm:$0xff]
    %v988 = vld [vmem:[#allocation2 + $0x300] sm:$0xff]
    %v989 = vld [vmem:[#allocation2 + $0x310] sm:$0xff]
    %v990 = vld [vmem:[#allocation2 + $0x320] sm:$0xff]
    %v991 = vld [vmem:[#allocation2 + $0x330] sm:$0xff]
    %v992 = vld [vmem:[#allocation2 + $0x340] sm:$0xff]
    %v993 = vld [vmem:[#allocation2 + $0x350] sm:$0xff]
    %v994 = vld [vmem:[#allocation2 + $0x360] sm:$0xff]
    %v995 = vld [vmem:[#allocation2 + $0x370] sm:$0xff]
    %v996 = vld [vmem:[#allocation2 + $0x380] ss:$0 sm:$0xff]
    %997 = vmatprep.subr.mxu0 0.0
    %998 = vmatpush1.msra.mxu0 %v980
    %999 = vmatprep.subr.mxu0 0.0
    %1000 = vmatpush1.msra.mxu0 %v981
    %1001 = vmatprep.subr.mxu0 0.0
    %1002 = vmatpush1.msra.mxu0 %v982
    %1003 = vmatprep.subr.mxu0 0.0
    %1004 = vmatpush1.msra.mxu0 %v983
    %1005 = vmatprep.subr.mxu0 0.0
    %1006 = vmatpush1.msra.mxu0 %v984
    %1007 = vmatprep.subr.mxu0 0.0
    %1008 = vmatpush1.msra.mxu0 %v985
    %1009 = vmatprep.subr.mxu0 0.0
    %1010 = vmatpush1.msra.mxu0 %v986
    %1011 = vmatprep.subr.mxu0 0.0
    %1012 = vmatpush1.msra.mxu0 %v987
    %1013 = vmatprep.subr.mxu0 0.0
    %1014 = vmatpush1.msra.mxu0 %v988
    %1015 = vmatprep.subr.mxu0 0.0
    %1016 = vmatpush1.msra.mxu0 %v989
    %1017 = vmatprep.subr.mxu0 0.0
    %1018 = vmatpush1.msra.mxu0 %v990
    %1019 = vmatprep.subr.mxu0 0.0
    %1020 = vmatpush1.msra.mxu0 %v991
    %1021 = vmatprep.subr.mxu0 0.0
    %1022 = vmatpush1.msra.mxu0 %v992
    %1023 = vmatprep.subr.mxu0 0.0
    %1024 = vmatpush1.msra.mxu0 %v993
    %1025 = vmatprep.subr.mxu0 0.0
    %1026 = vmatpush1.msra.mxu0 %v994
    %1027 = vmatprep.subr.mxu0 0.0
    %1028 = vmatpush1.msra.mxu0 %v995
    %1029 = vmatprep.subr.mxu0 0.0
    %1030 = vmatpush1.msra.mxu0 0.0
    %1031 = vmatprep.subr.mxu0 0.0
    %1032 = vmatpush1.msra.mxu0 0.0
    %1033 = vmatprep.subr.mxu0 0.0
    %1034 = vmatpush1.msra.mxu0 0.0
    %1035 = vmatprep.subr.mxu0 0.0
    %1036 = vmatpush1.msra.mxu0 0.0
    %1037 = vmatprep.subr.mxu0 0.0
    %1038 = vmatpush1.msra.mxu0 0.0
    %1039 = vmatprep.subr.mxu0 0.0
    %1040 = vmatpush1.msra.mxu0 0.0
    %1041 = vmatprep.subr.mxu0 0.0
    %1042 = vmatpush1.msra.mxu0 0.0
    %1043 = vmatprep.subr.mxu0 0.0
    %1044 = vmatpush1.msra.mxu0 0.0
    %1045 = vmatprep.subr.mxu0 0.0
    %1046 = vmatpush1.msra.mxu0 0.0
    %1047 = vmatprep.subr.mxu0 0.0
    %1048 = vmatpush1.msra.mxu0 0.0
    %1049 = vmatprep.subr.mxu0 0.0
    %1050 = vmatpush1.msra.mxu0 0.0
    %1051 = vmatprep.subr.mxu0 0.0
    %1052 = vmatpush1.msra.mxu0 0.0
    %1053 = vmatprep.subr.mxu0 0.0
    %1054 = vmatpush1.msra.mxu0 0.0
    %1055 = vmatprep.subr.mxu0 0.0
    %1056 = vmatpush1.msra.mxu0 0.0
    %1057 = vmatprep.subr.mxu0 0.0
    %1058 = vmatpush1.msra.mxu0 0.0
    %1059 = vmatprep.subr.mxu0 0.0
    %1060 = vmatpush1.msra.mxu0 0.0
    %1061 = vmatprep.mubr.f32.mxu0 0.0
    %1062 = vmatmul.mubr.f32.gmra.mrb[0].mxu0 %v978
    %v1063 = vpop.f32.mrb[0].mxu0
    %v1064 = vadd.f32 %v996, %v1063
    %v1065 = vpop.f32.mrb[0].mxu0
    %1066 = vmatprep.mubr.f32.mxu0 0.0
    %1067 = vmatmul.mubr.f32.gmra.mrb[0].mxu0 %v979
    %v1068 = vpop.f32.mrb[0].mxu0
    %v1069 = vadd.f32 %v996, %v1068
    %v1070 = vpop.f32.mrb[0].mxu0
    %1071 = vdwg.mxu0
    %v1072 = vadd.f32 %v1064, %v1069
    %v1073 = vrot.slane %v1072, 4
    %v1074 = vadd.f32 %v1072, %v1073
    %v1075 = vrot.slane %v1074, 2
    %v1076 = vadd.f32 %v1074, %v1075
    %v1077 = vrot.slane %v1076, 1
    %v1078 = vadd.f32 %v1076, %v1077
    %v1079 = vmul.f32 %v1078, 0.0625
    %v1080 = vmul.f32 %v1064, %v1064
    %v1081 = vmul.f32 %v1069, %v1069
    %v1082 = vadd.f32 %v1080, %v1081
    %v1083 = vrot.slane %v1082, 4
    %v1084 = vadd.f32 %v1082, %v1083
    %v1085 = vrot.slane %v1084, 2
    %v1086 = vadd.f32 %v1084, %v1085
    %v1087 = vrot.slane %v1086, 1
    %v1088 = vadd.f32 %v1086, %v1087
    %v1089 = vmul.f32 %v1088, 0.0625
    %v1090 = vmul.f32 %v1079, %v1079
    %v1091 = vsub.f32 %v1089, %v1090
    %v1092 = vmax.f32 %v1091, 0.0
    %v1093 = vsub.f32 %v1064, %v1079
    %v1094 = vsub.f32 %v1069, %v1079
    %v1095 = vadd.f32 %v1092, 1e-05
    %v1096 = vrsqrt.pop %v1095
    %v1097 = vmul.f32 %v1093, %v1096
    %v1098 = vmul.f32 %v1094, %v1096
    %v1099 = vld [vmem:[#allocation2 + $0x390] ss:$0 sm:$0xff]
    %v1100 = vmul.f32 %v1097, %v1099
    %v1101 = vmul.f32 %v1098, %v1099
    %v1102 = vld [vmem:[#allocation2 + $0x3a0] ss:$0 sm:$0xff]
    %v1103 = vadd.f32 %v1100, %v1102
    %v1104 = vadd.f32 %v1101, %v1102
    %v1105 = vmax.f32 %v1103, 0.0
    %v1106 = vmax.f32 %v1104, 0.0
    %v1107 = vld [vmem:[#allocation2 + $0x3b0] sm:$0xff]
    %v1108 = vld [vmem:[#allocation2 + $0x3c0] sm:$0xff]
    %v1109 = vld [vmem:[#allocation2 + $0x3d0] sm:$0xff]
    %v1110 = vld [vmem:[#allocation2 + $0x3e0] sm:$0xff]
    %v1111 = vld [vmem:[#allocation2 + $0x3f0] sm:$0xff]
    %v1112 = vld [vmem:[#allocation2 + $0x400] sm:$0xff]
    %v1113 = vld [vmem:[#allocation2 + $0x410] sm:$0xff]
    %v1114 = vld [vmem:[#allocation2 + $0x420] sm:$0xff]
    %v1115 = vld [vmem:[#allocation2 + $0x430] sm:$0xff]
    %v1116 = vld [vmem:[#allocation2 + $0x440] sm:$0xff]
    %v1117 = vld [vmem:[#allocation2 + $0x450] sm:$0xff]
    %v1118 = vld [vmem:[#allocation2 + $0x460] sm:$0xff]
    %v1119 = vld [vmem:[#allocation2 + $0x470] sm:$0xff]
    %v1120 = vld [vmem:[#allocation2 + $0x480] sm:$0xff]
    %v1121 = vld [vmem:[#allocation2 + $0x490] sm:$0xff]
    %v1122 = vld [vmem:[#allocation2 + $0x4a0] sm:$0xff]
    %v1123 = vld [vmem:[#allocation2 + $0x4b0] ss:$0 sm:$0xff]
    %1124 = vmatprep.subr.mxu0 0.0
    %1125 = vmatpush1.msra.mxu0 %v1107
    %1126 = vmatprep.subr.mxu0 0.0
    %1127 = vmatpush1.msra.mxu0 %v1108
    %1128 = vmatprep.subr.mxu0 0.0
    %1129 = vmatpush1.msra.mxu0 %v1109
    %1130 = vmatprep.subr.mxu0 0.0
    %1131 = vmatpush1.msra.mxu0 %v1110
    %1132 = vmatprep.subr.mxu0 0.0
    %1133 = vmatpush1.msra.mxu0 %v1111
    %1134 = vmatprep.subr.mxu0 0.0
    %1135 = vmatpush1.msra.mxu0 %v1112
    %1136 = vmatprep.subr.mxu0 0.0
    %1137 = vmatpush1.msra.mxu0 %v1113
    %1138 = vmatprep.subr.mxu0 0.0
    %1139 = vmatpush1.msra.mxu0 %v1114
    %1140 = vmatprep.subr.mxu0 0.0
    %1141 = vmatpush1.msra.mxu0 %v1115
    %1142 = vmatprep.subr.mxu0 0.0
    %1143 = vmatpush1.msra.mxu0 %v1116
    %1144 = vmatprep.subr.mxu0 0.0
    %1145 = vmatpush1.msra.mxu0 %v1117
    %1146 = vmatprep.subr.mxu0 0.0
    %1147 = vmatpush1.msra.mxu0 %v1118
    %1148 = vmatprep.subr.mxu0 0.0
    %1149 = vmatpush1.msra.mxu0 %v1119
    %1150 = vmatprep.subr.mxu0 0.0
    %1151 = vmatpush1.msra.mxu0 %v1120
    %1152 = vmatprep.subr.mxu0 0.0
    %1153 = vmatpush1.msra.mxu0 %v1121
    %1154 = vmatprep.subr.mxu0 0.0
    %1155 = vmatpush1.msra.mxu0 %v1122
    %1156 = vmatprep.subr.mxu0 0.0
    %1157 = vmatpush1.msra.mxu0 0.0
    %1158 = vmatprep.subr.mxu0 0.0
    %1159 = vmatpush1.msra.mxu0 0.0
    %1160 = vmatprep.subr.mxu0 0.0
    %1161 = vmatpush1.msra.mxu0 0.0
    %1162 = vmatprep.subr.mxu0 0.0
    %1163 = vmatpush1.msra.mxu0 0.0
    %1164 = vmatprep.subr.mxu0 0.0
    %1165 = vmatpush1.msra.mxu0 0.0
    %1166 = vmatprep.subr.mxu0 0.0
    %1167 = vmatpush1.msra.mxu0 0.0
    %1168 = vmatprep.subr.mxu0 0.0
    %1169 = vmatpush1.msra.mxu0 0.0
    %1170 = vmatprep.subr.mxu0 0.0
    %1171 = vmatpush1.msra.mxu0 0.0
    %1172 = vmatprep.subr.mxu0 0.0
    %1173 = vmatpush1.msra.mxu0 0.0
    %1174 = vmatprep.subr.mxu0 0.0
    %1175 = vmatpush1.msra.mxu0 0.0
    %1176 = vmatprep.subr.mxu0 0.0
    %1177 = vmatpush1.msra.mxu0 0.0
    %1178 = vmatprep.subr.mxu0 0.0
    %1179 = vmatpush1.msra.mxu0 0.0
    %1180 = vmatprep.subr.mxu0 0.0
    %1181 = vmatpush1.msra.mxu0 0.0
    %1182 = vmatprep.subr.mxu0 0.0
    %1183 = vmatpush1.msra.mxu0 0.0
    %1184 = vmatprep.subr.mxu0 0.0
    %1185 = vmatpush1.msra.mxu0 0.0
    %1186 = vmatprep.subr.mxu0 0.0
    %1187 = vmatpush1.msra.mxu0 0.0
    %1188 = vmatprep.mubr.f32.mxu0 0.0
    %1189 = vmatmul.mubr.f32.gmra.mrb[0].mxu0 %v1105
    %v1190 = vpop.f32.mrb[0].mxu0
    %v1191 = vadd.f32 %v1123, %v1190
    %v1192 = vpop.f32.mrb[0].mxu0
    %1193 = vmatprep.mubr.f32.mxu0 0.0
    %1194 = vmatmul.mubr.f32.gmra.mrb[0].mxu0 %v1106
    %v1195 = vpop.f32.mrb[0].mxu0
    %v1196 = vadd.f32 %v1123, %v1195
    %v1197 = vpop.f32.mrb[0].mxu0
    %1198 = vdwg.mxu0
    %v1199 = vmax.f32 %v1191, 0.0
    %v1200 = vmax.f32 %v1196, 0.0
    %v1201 = vld [vmem:[#allocation2 + $0x4c0] sm:$0xff]
    %v1202 = vld [vmem:[#allocation2 + $0x4d0] sm:$0xff]
    %v1203 = vld [vmem:[#allocation2 + $0x4e0] sm:$0xff]
    %v1204 = vld [vmem:[#allocation2 + $0x4f0] sm:$0xff]
    %v1205 = vld [vmem:[#allocation2 + $0x500] sm:$0xff]
    %v1206 = vld [vmem:[#allocation2 + $0x510] sm:$0xff]
    %v1207 = vld [vmem:[#allocation2 + $0x520] sm:$0xff]
    %v1208 = vld [vmem:[#allocation2 + $0x530] sm:$0xff]
    %v1209 = vld [vmem:[#allocation2 + $0x540] sm:$0xff]
    %v1210 = vld [vmem:[#allocation2 + $0x550] sm:$0xff]
    %v1211 = vld [vmem:[#allocation2 + $0x560] sm:$0xff]
    %v1212 = vld [vmem:[#allocation2 + $0x570] sm:$0xff]
    %v1213 = vld [vmem:[#allocation2 + $0x580] sm:$0xff]
    %v1214 = vld [vmem:[#allocation2 + $0x590] sm:$0xff]
    %v1215 = vld [vmem:[#allocation2 + $0x5a0] sm:$0xff]
    %v1216 = vld [vmem:[#allocation2 + $0x5b0] sm:$0xff]
    %v1217 = vld [vmem:[#allocation2 + $0x5c0] ss:$0 sm:$0xff]
    %1218 = vmatprep.subr.mxu0 0.0
    %1219 = vmatpush1.msra.mxu0 %v1201
    %1220 = vmatprep.subr.mxu0 0.0
    %1221 = vmatpush1.msra.mxu0 %v1202
    %1222 = vmatprep.subr.mxu0 0.0
    %1223 = vmatpush1.msra.mxu0 %v1203
    %1224 = vmatprep.subr.mxu0 0.0
    %1225 = vmatpush1.msra.mxu0 %v1204
    %1226 = vmatprep.subr.mxu0 0.0
    %1227 = vmatpush1.msra.mxu0 %v1205
    %1228 = vmatprep.subr.mxu0 0.0
    %1229 = vmatpush1.msra.mxu0 %v1206
    %1230 = vmatprep.subr.mxu0 0.0
    %1231 = vmatpush1.msra.mxu0 %v1207
    %1232 = vmatprep.subr.mxu0 0.0
    %1233 = vmatpush1.msra.mxu0 %v1208
    %1234 = vmatprep.subr.mxu0 0.0
    %1235 = vmatpush1.msra.mxu0 %v1209
    %1236 = vmatprep.subr.mxu0 0.0
    %1237 = vmatpush1.msra.mxu0 %v1210
    %1238 = vmatprep.subr.mxu0 0.0
    %1239 = vmatpush1.msra.mxu0 %v1211
    %1240 = vmatprep.subr.mxu0 0.0
    %1241 = vmatpush1.msra.mxu0 %v1212
    %1242 = vmatprep.subr.mxu0 0.0
    %1243 = vmatpush1.msra.mxu0 %v1213
    %1244 = vmatprep.subr.mxu0 0.0
    %1245 = vmatpush1.msra.mxu0 %v1214
    %1246 = vmatprep.subr.mxu0 0.0
    %1247 = vmatpush1.msra.mxu0 %v1215
    %1248 = vmatprep.subr.mxu0 0.0
    %1249 = vmatpush1.msra.mxu0 %v1216
    %1250 = vmatprep.subr.mxu0 0.0
    %1251 = vmatpush1.msra.mxu0 0.0
    %1252 = vmatprep.subr.mxu0 0.0
    %1253 = vmatpush1.msra.mxu0 0.0
    %1254 = vmatprep.subr.mxu0 0.0
    %1255 = vmatpush1.msra.mxu0 0.0
    %1256 = vmatprep.subr.mxu0 0.0
    %1257 = vmatpush1.msra.mxu0 0.0
    %1258 = vmatprep.subr.mxu0 0.0
    %1259 = vmatpush1.msra.mxu0 0.0
    %1260 = vmatprep.subr.mxu0 0.0
    %1261 = vmatpush1.msra.mxu0 0.0
    %1262 = vmatprep.subr.mxu0 0.0
    %1263 = vmatpush1.msra.mxu0 0.0
    %1264 = vmatprep.subr.mxu0 0.0
    %1265 = vmatpush1.msra.mxu0 0.0
    %1266 = vmatprep.subr.mxu0 0.0
    %1267 = vmatpush1.msra.mxu0 0.0
    %1268 = vmatprep.subr.mxu0 0.0
    %1269 = vmatpush1.msra.mxu0 0.0
    %1270 = vmatprep.subr.mxu0 0.0
    %1271 = vmatpush1.msra.mxu0 0.0
    %1272 = vmatprep.subr.mxu0 0.0
    %1273 = vmatpush1.msra.mxu0 0.0
    %1274 = vmatprep.subr.mxu0 0.0
    %1275 = vmatpush1.msra.mxu0 0.0
    %1276 = vmatprep.subr.mxu0 0.0
    %1277 = vmatpush1.msra.mxu0 0.0
    %1278 = vmatprep.subr.mxu0 0.0
    %1279 = vmatpush1.msra.mxu0 0.0
    %1280 = vmatprep.subr.mxu0 0.0
    %1281 = vmatpush1.msra.mxu0 0.0
    %1282 = vmatprep.mubr.f32.mxu0 0.0
    %1283 = vmatmul.mubr.f32.gmra.mrb[0].mxu0 %v1199
    %v1284 = vpop.f32.mrb[0].mxu0
    %v1285 = vadd.f32 %v1217, %v1284
    %v1286 = vpop.f32.mrb[0].mxu0
    %1287 = vmatprep.mubr.f32.mxu0 0.0
    %1288 = vmatmul.mubr.f32.gmra.mrb[0].mxu0 %v1200
    %v1289 = vpop.f32.mrb[0].mxu0
    %v1290 = vadd.f32 %v1217, %v1289
    %v1291 = vpop.f32.mrb[0].mxu0
    %1292 = vdwg.mxu0
    %1293 = vst [vmem:[#allocation5] sm:$0xff] %v1285
    %1294 = vst [vmem:[#allocation5 + $0x8] sm:$0xff] %v1290
    // Predicated region
    $region30: #{tpu_custom_call.1} parent=1 // pred_check
      _
    $region31: #{tpu_custom_call.1} parent=1 // pred_check_branch
      %1296 = sbr.rel (0) target = $region33
    $region32: #{tpu_custom_call.1} parent=1 // pred_region
      %s1298 = ssub.s32 256, 256
      %1299 = vsyncadd [#allocation4], %s1298
      %s1300 = sshll.u32 [#allocation5], 4
      %s1301 = int_to_ptr.vmem [resolvable:$true] %s1300
      %1306 = dma.vmem_to_hbm [thread:$0]  %s1301, 256, %s6, [#allocation4], 128, 128, 8
    $region33: #{tpu_custom_call.1} parent=1 // pred_fallthru
      _
    // Predicated region
    $region34: #{tpu_custom_call.1} parent=1 // pred_check
      _
    $region35: #{tpu_custom_call.1} parent=1 // pred_check_branch
      %1308 = sbr.rel (0) target = $region37
    $region36: #{tpu_custom_call.1} parent=1 // pred_region
      %1309 = dma.done [#allocation4], 256
    $region37: #{tpu_custom_call.1} parent=1 // pred_fallthru
      _
    %1310 = vsyncpa [#allocation3], 1
    %1311 = vsyncpa [#allocation4], 1

</llo_original>
